<compile_context>
chip_gen: v7x
topology: tpu7x:2x2x1
jax: 0.10.0
libtpu: 0.0.40
codegen_flags: <defaults>
</compile_context>

<pallas_src>
import math
from functools import partial

import numpy as np
import jax
import jax.numpy as jnp
from jax.experimental import pallas as pl
from jax.experimental.pallas import tpu as pltpu

MASK_DEGREE = 3
SH_DEGREE = 2
POS_EMB_DIM = 48                       # positional_embedding_dim (PointEmbed hidden_dim)
PTV3_OUT_DIM = 64                      # ptv3_output_dim
MASK_DIM = 2 * MASK_DEGREE + 1         # 7
SH_DIM = (SH_DEGREE + 1) ** 2          # 9
HEAD_DIM = 6 + 3 + MASK_DIM + SH_DIM   # 25  (ortho | positions | mask | sh)
N_FREQ = POS_EMB_DIM // 6              # 8
VEC_DIM = N_FREQ + HEAD_DIM            # 33  packed column [e(8); b_fold(25)]
_HALF_PI = 0.5 * math.pi


def _decoder_kernel(pts_ref, w_ref, vec_ref, out_ref, emb_ref):
    """Channel-first fused PointEmbed + (folded) linear decoder.

    pts_ref : (3, T)    surface points (channel-first row tile)
    w_ref   : (25, 48)  folded weight  w_heads^T @ w_enc^T
    vec_ref : (33, 1)   packed column  [e (8); b_fold (25)]
    out_ref : (25, T)   [ortho(6) | positions(3) | mask(7) | sh(9)]
    emb_ref : (48, T)   VMEM scratch for the Fourier embedding
    """
    pts = pts_ref[...]                              # (3, T) f32
    e = vec_ref[0:N_FREQ, :]                        # (8, 1)  Fourier frequencies
    b = vec_ref[N_FREQ:VEC_DIM, :]                  # (25, 1) folded bias

    # --- PointEmbed.embed -----------------------------------------------------
    # basis is block-diagonal ([e|0|0; 0|e|0; 0|0|e]) so the (T,3)@(3,24) matmul
    # reduces to three VPU broadcast multiplies; the six 8-row pieces are sin'd
    # and written straight into aligned scratch slices (no concatenate copies).
    px = e * pts[0:1, :]                            # (8, T)
    py = e * pts[1:2, :]
    pz = e * pts[2:3, :]
    emb_ref[0 * N_FREQ:1 * N_FREQ, :] = jnp.sin(px)
    emb_ref[1 * N_FREQ:2 * N_FREQ, :] = jnp.sin(py)
    emb_ref[2 * N_FREQ:3 * N_FREQ, :] = jnp.sin(pz)
    # cos(x) == sin(x + pi/2): keep everything on the same EUP op.
    emb_ref[3 * N_FREQ:4 * N_FREQ, :] = jnp.sin(px + _HALF_PI)
    emb_ref[4 * N_FREQ:5 * N_FREQ, :] = jnp.sin(py + _HALF_PI)
    emb_ref[5 * N_FREQ:6 * N_FREQ, :] = jnp.sin(pz + _HALF_PI)

    # --- folded encoder + heads: single (25,48)@(48,T) matmul + bias ----------
    out = jnp.dot(w_ref[...], emb_ref[...],
                  preferred_element_type=jnp.float32) + b            # (25, T)

    out_ref[...] = out
    # residual fused in-kernel: rows 6:9 hold delta positions -> emit positions.
    out_ref[6:9, :] = out[6:9, :] + pts


def _pick_tile_rows(rows, cap=8192):
    """Large tiles amortize the ~0.35us/grid-step overhead.  Keep the grid at an
    EVEN count >= 2 so v7x's two TensorCores split the 'parallel' axis evenly."""
    if rows <= 128:
        return 128
    num = max(2, -(-rows // cap))
    if num % 2:
        num += 1
    tile = -(-rows // num)
    tile = max(128, ((tile + 127) // 128) * 128)
    return min(tile, cap)


def pack_params(params):
    """One-time parameter packing / matmul folding.  Call at model load, NOT per
    forward (keeps the per-call path to two small device arrays)."""
    basis = jnp.asarray(params["basis"], jnp.float32)                    # (3, 24)
    e = basis[0, :N_FREQ]                                                # (8,)

    # PointEmbed's basis must be block-diagonal with identical frequency rows;
    # the kernel relies on it, so verify once here (cheap, load-time only).
    basis_np = np.asarray(jax.device_get(basis))
    e_np = basis_np[0, :N_FREQ]
    expected = np.zeros_like(basis_np)
    expected[0, 0:N_FREQ] = e_np
    expected[1, N_FREQ:2 * N_FREQ] = e_np
    expected[2, 2 * N_FREQ:3 * N_FREQ] = e_np
    assert np.allclose(basis_np, expected), "PointEmbed basis is not block-diagonal"

    w_enc_t = jnp.asarray(params["w_enc"], jnp.float32).T                # (64, 48)
    w_head_t = jnp.concatenate(
        [params["w_ortho"], params["w_pos"],
         params["w_mask"], params["w_sh"]], axis=1).astype(jnp.float32).T  # (25, 64)
    b_enc_col = jnp.asarray(params["b_enc"], jnp.float32).reshape(PTV3_OUT_DIM, 1)
    b_head_col = jnp.concatenate(
        [params["b_ortho"].reshape(-1), params["b_pos"].reshape(-1),
         params["b_mask"].reshape(-1), params["b_sh"].reshape(-1)]
    ).astype(jnp.float32).reshape(HEAD_DIM, 1)

    # Fold the 48->64 encoder into the 64->25 heads (no nonlinearity between
    # them in the PTv3 stand-in) -> one (25, 48) matmul inside the kernel.
    # TODO(synk): undo this fold once a real (nonlinear) PTv3 block replaces the
    # linear encoder stand-in.
    w_fold = w_head_t @ w_enc_t                                          # (25, 48)
    b_fold = w_head_t @ b_enc_col + b_head_col                           # (25, 1)
    vec_pack = jnp.concatenate([e.reshape(N_FREQ, 1), b_fold], axis=0)   # (33, 1)
    return {"w_fold": w_fold, "vec_pack": vec_pack}


@partial(jax.jit, static_argnames=("tile", "drop_prob", "apply_dropout"))
def _forward_jit(surface_points, w_fold, vec_pack, rng, *, tile, drop_prob,
                 apply_dropout):
    B, N, _ = surface_points.shape
    sp = surface_points.astype(jnp.float32)

    if apply_dropout:
        # Matches the PyTorch reference: raw Bernoulli multiply, no 1/(1-p)
        # rescale (the reference uses bernoulli_, not nn.Dropout).  The residual
        # below uses the dropped points, as the reference does.
        keep = jax.random.bernoulli(rng, 1.0 - drop_prob, (B, N)).astype(sp.dtype)
        sp = sp * keep[..., None]

    rows = B * N
    num_tiles = -(-rows // tile)
    rows_p = num_tiles * tile

    # channel-first point slab, padded to a whole number of row tiles; fuses
    # with the dropout multiply under this jit.
    pts_cf = sp.reshape(rows, 3).T                                       # (3, rows)
    if rows_p != rows:
        pts_cf = jnp.pad(pts_cf, ((0, 0), (0, rows_p - rows)))

    out_cf = pl.pallas_call(
        _decoder_kernel,
        out_shape=jax.ShapeDtypeStruct((HEAD_DIM, rows_p), jnp.float32),
        grid_spec=pltpu.PrefetchScalarGridSpec(
            num_scalar_prefetch=0,
            grid=(num_tiles,),
            in_specs=[
                pl.BlockSpec((3, tile), lambda i: (0, i)),               # points
                pl.BlockSpec((HEAD_DIM, POS_EMB_DIM), lambda i: (0, 0)),  # w_fold
                pl.BlockSpec((VEC_DIM, 1), lambda i: (0, 0)),            # [e; b]
            ],
            out_specs=pl.BlockSpec((HEAD_DIM, tile), lambda i: (0, i)),
            scratch_shapes=[pltpu.VMEM((POS_EMB_DIM, tile), jnp.float32)],
        ),
        compiler_params=pltpu.CompilerParams(
            dimension_semantics=("parallel",),
            vmem_limit_bytes=24 * 1024 * 1024,   # working set < ~4 MiB/core
        ),
    )(pts_cf, w_fold, vec_pack)                                          # (25, rows_p)

    # ---- un-pack (fused by XLA under this jit into one pass over out_cf) -----
    out = out_cf[:, :rows].T                                             # (rows, 25)
    ortho = out[:, 0:6].reshape(B, N, 6)
    positions = out[:, 6:9].reshape(B, N, 3)        # residual already applied
    mask_p = out[:, 9:9 + MASK_DIM].reshape(B, N, MASK_DIM)
    sh_p = out[:, 9 + MASK_DIM:HEAD_DIM].reshape(B, N, SH_DIM)

    mash_dict = {
        "ortho_poses": ortho,
        "positions": positions,
        "mask_params": mask_p,
        "sh_params": sh_p,
    }
    return {"mash_params_dict": mash_dict}


def ptv3_shape_decoder_forward(surface_points, packed_params, drop_prob=0.0,
                               deterministic=False, rng=None, tile_rows=None):
    """surface_points: (B, N, 3) float32; packed_params: output of pack_params."""
    B, N, _ = surface_points.shape
    rows = B * N
    tile = int(tile_rows) if tile_rows is not None else _pick_tile_rows(rows)

    apply_dropout = (drop_prob > 0.0) and (not deterministic)
    if apply_dropout and rng is None:
        raise ValueError("rng is required when drop_prob > 0 and not deterministic")
    if rng is None:
        rng = jax.random.PRNGKey(0)   # unused placeholder; keeps jit signature stable

    return _forward_jit(surface_points, packed_params["w_fold"],
                        packed_params["vec_pack"], rng,
                        tile=tile, drop_prob=float(drop_prob),
                        apply_dropout=apply_dropout)


def make_params(key):
    """Deterministic synthetic parameter init (shapes per module __init__)."""
    # PointEmbed basis: e = 2**arange(hidden_dim//6) * pi, block-diagonal (3, 24)
    e = (2.0 ** jnp.arange(N_FREQ, dtype=jnp.float32)) * math.pi        # (8,)
    zeros = jnp.zeros((N_FREQ,), jnp.float32)
    basis = jnp.stack([
        jnp.concatenate([e, zeros, zeros]),
        jnp.concatenate([zeros, e, zeros]),
        jnp.concatenate([zeros, zeros, e]),
    ], axis=0)                                                          # (3, 24)

    def linear(k, fan_in, fan_out):
        kw, kb = jax.random.split(k)
        bound = 1.0 / math.sqrt(fan_in)
        w = jax.random.uniform(kw, (fan_in, fan_out), jnp.float32, -bound, bound)
        b = jax.random.uniform(kb, (1, fan_out), jnp.float32, -bound, bound)
        return w, b

    k_enc, k_o, k_p, k_m, k_s = jax.random.split(key, 5)
    w_enc, b_enc = linear(k_enc, POS_EMB_DIM, PTV3_OUT_DIM)
    w_ortho, b_ortho = linear(k_o, PTV3_OUT_DIM, 6)
    w_pos, b_pos = linear(k_p, PTV3_OUT_DIM, 3)
    w_mask, b_mask = linear(k_m, PTV3_OUT_DIM, MASK_DIM)
    w_sh, b_sh = linear(k_s, PTV3_OUT_DIM, SH_DIM)

    return dict(basis=basis,
                w_enc=w_enc, b_enc=b_enc,
                w_ortho=w_ortho, b_ortho=b_ortho,
                w_pos=w_pos, b_pos=b_pos,
                w_mask=w_mask, b_mask=b_mask,
                w_sh=w_sh, b_sh=b_sh)


def _reference_forward(sp, p):
    """Pure-JAX reference of the same math (un-folded, channel-last)."""
    proj = jnp.einsum("bnd,de->bne", sp, p["basis"],
                      precision=jax.lax.Precision.HIGHEST)              # (B,N,24)
    emb = jnp.concatenate([jnp.sin(proj), jnp.cos(proj)], axis=-1)      # (B,N,48)
    feat = emb @ p["w_enc"] + p["b_enc"]                                # (B,N,64)
    ortho = feat @ p["w_ortho"] + p["b_ortho"]
    dpos = feat @ p["w_pos"] + p["b_pos"]
    maskp = feat @ p["w_mask"] + p["b_mask"]
    shp = feat @ p["w_sh"] + p["b_sh"]
    return ortho, sp + dpos, maskp, shp


if __name__ == "__main__":
    key = jax.random.PRNGKey(0)
    k_pts, k_params = jax.random.split(key)

    B, N = 2, 256
    # Note: PointEmbed frequencies go up to 2^7*pi; f32 sin loses precision for
    # coordinates far outside [-1, 1], so inputs are kept normalized.
    surface_points = jax.random.normal(k_pts, (B, N, 3), jnp.float32) * 0.5
    params = make_params(k_params)
    packed = pack_params(params)           # once at "model load"

    out = ptv3_shape_decoder_forward(surface_points, packed, drop_prob=0.0)
    out = jax.block_until_ready(out)

    md = out["mash_params_dict"]
    assert md["ortho_poses"].shape == (B, N, 6)
    assert md["positions"].shape == (B, N, 3)
    assert md["mask_params"].shape == (B, N, MASK_DIM)
    assert md["sh_params"].shape == (B, N, SH_DIM)
    assert all(bool(jnp.all(jnp.isfinite(v))) for v in md.values())

    # numerical sanity vs. pure-JAX reference (fold + fused residual are exact
    # up to f32 accumulation / transcendental differences)
    r_ortho, r_pos, r_mask, r_sh = _reference_forward(surface_points, params)
    for got, ref in ((md["ortho_poses"], r_ortho), (md["positions"], r_pos),
                     (md["mask_params"], r_mask), (md["sh_params"], r_sh)):
        assert bool(jnp.allclose(got, ref, atol=2e-2, rtol=2e-2)), "mismatch vs reference"

    print("KERNEL_OK")
</pallas_src>

<mosaic_0001>
module attributes {stable_mosaic.version = 11 : i64} {
  func.func @_decoder_kernel(%arg0: i32, %arg1: memref<3x256xf32, #tpu.memory_space<vmem>>, %arg2: memref<25x48xf32, #tpu.memory_space<vmem>>, %arg3: memref<33x1xf32, #tpu.memory_space<vmem>>, %arg4: memref<25x256xf32, #tpu.memory_space<vmem>>, %arg5: memref<48x256xf32, #tpu.memory_space<vmem>>) attributes {dimension_semantics = [#tpu.dimension_semantics<parallel>], iteration_bounds = array<i64: 2>, scalar_prefetch = 0 : i64, scratch_operands = 1 : i64, tpu.core_type = #tpu.core_type<tc>, window_params = [{transform_indices = @transform_0, window_bounds = array<i64: 3, 256>}, {pipeline_mode = #tpu.pipeline_mode<synchronous>, transform_indices = @transform_1, window_bounds = array<i64: 25, 48>}, {pipeline_mode = #tpu.pipeline_mode<synchronous>, transform_indices = @transform_2, window_bounds = array<i64: 33, 1>}, {transform_indices = @transform_3, window_bounds = array<i64: 25, 256>}]} {
    %c0 = arith.constant 0 : index
    %c0_0 = arith.constant 0 : index
    %0 = vector.load %arg1[%c0, %c0_0] : memref<3x256xf32, #tpu.memory_space<vmem>>, vector<3x256xf32>
    %c0_1 = arith.constant 0 : index
    %c0_2 = arith.constant 0 : index
    %1 = vector.load %arg3[%c0_1, %c0_2] : memref<33x1xf32, #tpu.memory_space<vmem>>, vector<8x1xf32>
    %c8 = arith.constant 8 : index
    %c0_3 = arith.constant 0 : index
    %2 = vector.load %arg3[%c8, %c0_3] : memref<33x1xf32, #tpu.memory_space<vmem>>, vector<25x1xf32>
    %3 = vector.extract_strided_slice %0 {offsets = [0, 0], sizes = [1, 256], strides = [1, 1]} : vector<3x256xf32> to vector<1x256xf32>
    %4 = vector.broadcast %1 : vector<8x1xf32> to vector<8x256xf32>
    %5 = vector.broadcast %3 : vector<1x256xf32> to vector<8x256xf32>
    %6 = arith.mulf %4, %5 : vector<8x256xf32>
    %7 = vector.extract_strided_slice %0 {offsets = [1, 0], sizes = [1, 256], strides = [1, 1]} : vector<3x256xf32> to vector<1x256xf32>
    %8 = vector.broadcast %1 : vector<8x1xf32> to vector<8x256xf32>
    %9 = vector.broadcast %7 : vector<1x256xf32> to vector<8x256xf32>
    %10 = arith.mulf %8, %9 : vector<8x256xf32>
    %11 = vector.extract_strided_slice %0 {offsets = [2, 0], sizes = [1, 256], strides = [1, 1]} : vector<3x256xf32> to vector<1x256xf32>
    %12 = vector.broadcast %1 : vector<8x1xf32> to vector<8x256xf32>
    %13 = vector.broadcast %11 : vector<1x256xf32> to vector<8x256xf32>
    %14 = arith.mulf %12, %13 : vector<8x256xf32>
    %15 = math.sin %6 : vector<8x256xf32>
    %c0_4 = arith.constant 0 : index
    %c0_5 = arith.constant 0 : index
    %16 = vector.load %arg5[%c0_4, %c0_5] : memref<48x256xf32, #tpu.memory_space<vmem>>, vector<8x256xf32>
    tpu.vector_store %arg5[%c0_4, %c0_5], %15 {strides = array<i32>} : memref<48x256xf32, #tpu.memory_space<vmem>>, vector<8x256xf32>,
    %17 = math.sin %10 : vector<8x256xf32>
    %c8_6 = arith.constant 8 : index
    %c0_7 = arith.constant 0 : index
    %18 = vector.load %arg5[%c8_6, %c0_7] : memref<48x256xf32, #tpu.memory_space<vmem>>, vector<8x256xf32>
    tpu.vector_store %arg5[%c8_6, %c0_7], %17 {strides = array<i32>} : memref<48x256xf32, #tpu.memory_space<vmem>>, vector<8x256xf32>,
    %19 = math.sin %14 : vector<8x256xf32>
    %c16 = arith.constant 16 : index
    %c0_8 = arith.constant 0 : index
    %20 = vector.load %arg5[%c16, %c0_8] : memref<48x256xf32, #tpu.memory_space<vmem>>, vector<8x256xf32>
    tpu.vector_store %arg5[%c16, %c0_8], %19 {strides = array<i32>} : memref<48x256xf32, #tpu.memory_space<vmem>>, vector<8x256xf32>,
    %cst = arith.constant 1.57079637 : f32
    %21 = vector.broadcast %cst : f32 to vector<8x256xf32>
    %22 = arith.addf %6, %21 : vector<8x256xf32>
    %23 = math.sin %22 : vector<8x256xf32>
    %c24 = arith.constant 24 : index
    %c0_9 = arith.constant 0 : index
    %24 = vector.load %arg5[%c24, %c0_9] : memref<48x256xf32, #tpu.memory_space<vmem>>, vector<8x256xf32>
    tpu.vector_store %arg5[%c24, %c0_9], %23 {strides = array<i32>} : memref<48x256xf32, #tpu.memory_space<vmem>>, vector<8x256xf32>,
    %cst_10 = arith.constant 1.57079637 : f32
    %25 = vector.broadcast %cst_10 : f32 to vector<8x256xf32>
    %26 = arith.addf %10, %25 : vector<8x256xf32>
    %27 = math.sin %26 : vector<8x256xf32>
    %c32 = arith.constant 32 : index
    %c0_11 = arith.constant 0 : index
    %28 = vector.load %arg5[%c32, %c0_11] : memref<48x256xf32, #tpu.memory_space<vmem>>, vector<8x256xf32>
    tpu.vector_store %arg5[%c32, %c0_11], %27 {strides = array<i32>} : memref<48x256xf32, #tpu.memory_space<vmem>>, vector<8x256xf32>,
    %cst_12 = arith.constant 1.57079637 : f32
    %29 = vector.broadcast %cst_12 : f32 to vector<8x256xf32>
    %30 = arith.addf %14, %29 : vector<8x256xf32>
    %31 = math.sin %30 : vector<8x256xf32>
    %c40 = arith.constant 40 : index
    %c0_13 = arith.constant 0 : index
    %32 = vector.load %arg5[%c40, %c0_13] : memref<48x256xf32, #tpu.memory_space<vmem>>, vector<8x256xf32>
    tpu.vector_store %arg5[%c40, %c0_13], %31 {strides = array<i32>} : memref<48x256xf32, #tpu.memory_space<vmem>>, vector<8x256xf32>,
    %c0_14 = arith.constant 0 : index
    %c0_15 = arith.constant 0 : index
    %33 = vector.load %arg2[%c0_14, %c0_15] : memref<25x48xf32, #tpu.memory_space<vmem>>, vector<25x48xf32>
    %c0_16 = arith.constant 0 : index
    %c0_17 = arith.constant 0 : index
    %34 = vector.load %arg5[%c0_16, %c0_17] : memref<48x256xf32, #tpu.memory_space<vmem>>, vector<48x256xf32>
    %cst_18 = arith.constant dense<0.000000e+00> : vector<25x256xf32>
    %35 = tpu.matmul %33, %34, %cst_18 {dimension_numbers = #tpu.dot_dimension_numbers<[1], [0], [0], [1], [0, 0, 1, 1], [], []>} : vector<25x48xf32>, vector<48x256xf32>, vector<25x256xf32> -> vector<25x256xf32>
    %36 = vector.broadcast %2 : vector<25x1xf32> to vector<25x256xf32>
    %37 = arith.addf %35, %36 : vector<25x256xf32>
    %c0_19 = arith.constant 0 : index
    %c0_20 = arith.constant 0 : index
    %38 = vector.load %arg4[%c0_19, %c0_20] : memref<25x256xf32, #tpu.memory_space<vmem>>, vector<25x256xf32>
    tpu.vector_store %arg4[%c0_19, %c0_20], %37 {strides = array<i32>} : memref<25x256xf32, #tpu.memory_space<vmem>>, vector<25x256xf32>,
    %39 = vector.extract_strided_slice %37 {offsets = [6, 0], sizes = [3, 256], strides = [1, 1]} : vector<25x256xf32> to vector<3x256xf32>
    %40 = arith.addf %39, %0 : vector<3x256xf32>
    %c6 = arith.constant 6 : index
    %c0_21 = arith.constant 0 : index
    %41 = vector.load %arg4[%c6, %c0_21] : memref<25x256xf32, #tpu.memory_space<vmem>>, vector<3x256xf32>
    tpu.vector_store %arg4[%c6, %c0_21], %40 {strides = array<i32>} : memref<25x256xf32, #tpu.memory_space<vmem>>, vector<3x256xf32>,
    return
  }
  func.func @transform_0(%arg0: i32) -> (i32, i32) {
    %c0_i32 = arith.constant 0 : i32
    %c0_i32_0 = arith.constant 0 : i32
    return %c0_i32, %arg0 : i32, i32
  }
  func.func @transform_1(%arg0: i32) -> (i32, i32) {
    %c0_i32 = arith.constant 0 : i32
    %c0_i32_0 = arith.constant 0 : i32
    %c0_i32_1 = arith.constant 0 : i32
    return %c0_i32, %c0_i32_0 : i32, i32
  }
  func.func @transform_2(%arg0: i32) -> (i32, i32) {
    %c0_i32 = arith.constant 0 : i32
    %c0_i32_0 = arith.constant 0 : i32
    %c0_i32_1 = arith.constant 0 : i32
    return %c0_i32, %c0_i32_0 : i32, i32
  }
  func.func @transform_3(%arg0: i32) -> (i32, i32) {
    %c0_i32 = arith.constant 0 : i32
    %c0_i32_0 = arith.constant 0 : i32
    return %c0_i32, %arg0 : i32, i32
  }
}

</mosaic_0001>

<llo_original>
// kernel: _forward_jit.1
$region0: #{_forward_jit.1}
  #allocation0 [shape = 'u32[]', space=smem, size = 0x4, offset = 0x4, fixed_abs, tag = 'smem constant byte address 0x4 - core index']
  #allocation1 [shape = 'u32[144,128]{1,0:T(1,128)}', space=vmem, size = 0x12000, scoped, tag = 'internal scratch']
  #allocation2 [shape = 'f32[48,256]{1,0:T(8,128)}', space=vmem, size = 0xc000, scoped, tag = 'scratch operand']
  %s0 = inlined_call_operand.vmem [shape: f32[3,512], index: 0, kind: input, shape index: {}]
  %s1 = inlined_call_operand.vmem [shape: f32[25,48], index: 1, kind: input, shape index: {}]
  %s2 = inlined_call_operand.vmem [shape: f32[33,1], index: 2, kind: input, shape index: {}]
  %s3 = inlined_call_operand.vmem [shape: f32[25,512], index: 3, kind: output, shape index: {}]
  %s4 = sld [smem:[#allocation0]]
  $region64: #{_forward_jit.1} parent=0
    _
  %s6 = ssub.s32 1, %s4
  %s7 = scalar_select 0, %s6, %s4
  $region1: #{_forward_jit.1} parent=0
    #allocation3 [shape = 'u8[65536]{0}', space=vmem, size = 0x10000, scoped, tag = 'output window, operand 0']
    loop: start=0, step=1, limit=4
    $region2: #{_forward_jit.1} parent=1 // loop_pre_header
      _
    $region3: #{_forward_jit.1} parent=1 // loop_header
      %s9 = sphi 0, %s13
      %p10 = scmp.ge.s32.totalorder %s9, 4
      %s19 = sphi 0, %s21
      %s22 = sphi 0, %s19
      %s23 = sphi 0, %s22
      %s39 = sphi 0, %s23
      %s43 = sphi 0, %s43
      %s45 = sphi 0, %s43
      %s46 = sphi 0, %s45
      %s60 = sphi 0, %s46
      %s64 = sphi 0, %s64
      %s66 = sphi 0, %s64
      %s67 = sphi 0, %s66
      %s81 = sphi 0, %s67
      %s87 = sphi 0, %s89
      %s90 = sphi 0, %s87
      %s91 = sphi 0, %s90
      %s107 = sphi 0, %s91
    $region4: #{_forward_jit.1} parent=1 // loop_header_branch
      %12 = sbr.rel (%p10) target = $region8
    $region5: #{_forward_jit.1} parent=1 // loop_body
      %s14 = ssub.s32 %s9, 1
      %s15 = ssub.s32 %s9, 2
      %s16 = sadd.s32 %s9, 1
      %s17 = ssub.s32 %s9, %s16
      %p18 = scmp.eq.s32.totalorder %s17, 0
      %s20 = sadd.s32 %s19, 1
      %s21 = scalar_select %p18, %s19, %s20
      %p24 = pneg %p18
      %p25 = scmp.eq.s32.totalorder %s9, 1
      %p26 = por %p24, %p25
      %p27 = scmp.ne.s32.totalorder %s19, %s22
      %p28 = scmp.eq.s32.totalorder %s9, 0
      %p29 = por %p27, %p28
      %p30 = scmp.ne.s32.totalorder %s19, %s22
      %p31 = scmp.eq.s32.totalorder %s14, 1
      %p32 = por %p30, %p31
      %p33 = scmp.ne.s32.totalorder %s22, %s23
      %p34 = scmp.eq.s32.totalorder %s14, 0
      %p35 = por %p33, %p34
      %p36 = scmp.ne.s32.totalorder %s22, %s23
      %p37 = scmp.eq.s32.totalorder %s15, 1
      %p38 = por %p36, %p37
      %p40 = scmp.ne.s32.totalorder %s23, %s39
      %p41 = scmp.eq.s32.totalorder %s15, 0
      %p42 = por %p40, %p41
      %s44 = sadd.s32 %s43, 1
      %p47 = scmp.eq.s32.totalorder %s9, 1
      %p48 = scmp.ne.s32.totalorder %s43, %s45
      %p49 = scmp.eq.s32.totalorder %s9, 0
      %p50 = por %p48, %p49
      %p51 = scmp.ne.s32.totalorder %s43, %s45
      %p52 = scmp.eq.s32.totalorder %s14, 1
      %p53 = por %p51, %p52
      %p54 = scmp.ne.s32.totalorder %s45, %s46
      %p55 = scmp.eq.s32.totalorder %s14, 0
      %p56 = por %p54, %p55
      %p57 = scmp.ne.s32.totalorder %s45, %s46
      %p58 = scmp.eq.s32.totalorder %s15, 1
      %p59 = por %p57, %p58
      %p61 = scmp.ne.s32.totalorder %s46, %s60
      %p62 = scmp.eq.s32.totalorder %s15, 0
      %p63 = por %p61, %p62
      %s65 = sadd.s32 %s64, 1
      %p68 = scmp.eq.s32.totalorder %s9, 1
      %p69 = scmp.ne.s32.totalorder %s64, %s66
      %p70 = scmp.eq.s32.totalorder %s9, 0
      %p71 = por %p69, %p70
      %p72 = scmp.ne.s32.totalorder %s64, %s66
      %p73 = scmp.eq.s32.totalorder %s14, 1
      %p74 = por %p72, %p73
      %p75 = scmp.ne.s32.totalorder %s66, %s67
      %p76 = scmp.eq.s32.totalorder %s14, 0
      %p77 = por %p75, %p76
      %p78 = scmp.ne.s32.totalorder %s66, %s67
      %p79 = scmp.eq.s32.totalorder %s15, 1
      %p80 = por %p78, %p79
      %p82 = scmp.ne.s32.totalorder %s67, %s81
      %p83 = scmp.eq.s32.totalorder %s15, 0
      %p84 = por %p82, %p83
      %s85 = ssub.s32 %s9, %s16
      %p86 = scmp.eq.s32.totalorder %s85, 0
      %s88 = sadd.s32 %s87, 1
      %s89 = scalar_select %p86, %s87, %s88
      %p92 = pneg %p86
      %p93 = scmp.eq.s32.totalorder %s9, 1
      %p94 = por %p92, %p93
      %p95 = scmp.ne.s32.totalorder %s87, %s90
      %p96 = scmp.eq.s32.totalorder %s9, 0
      %p97 = por %p95, %p96
      %p98 = scmp.ne.s32.totalorder %s87, %s90
      %p99 = scmp.eq.s32.totalorder %s14, 1
      %p100 = por %p98, %p99
      %p101 = scmp.ne.s32.totalorder %s90, %s91
      %p102 = scmp.eq.s32.totalorder %s14, 0
      %p103 = por %p101, %p102
      %p104 = scmp.ne.s32.totalorder %s90, %s91
      %p105 = scmp.eq.s32.totalorder %s15, 1
      %p106 = por %p104, %p105
      %p108 = scmp.ne.s32.totalorder %s91, %s107
      %p109 = scmp.eq.s32.totalorder %s15, 0
      %p110 = por %p108, %p109
      %p111 = scmp.le.s32.totalorder 1, %s9
      %p112 = scmp.lt.s32.totalorder %s9, 3
      %p113 = pnand %p111, %p112
      %p114 = pneg %p113
      // Predicated region
      $region9: #{_forward_jit.1} parent=5 // pred_check
        _
      $region10: #{_forward_jit.1} parent=5 // pred_check_branch
        %116 = sbr.rel (%p113) target = $region12
      $region11: #{_forward_jit.1} parent=5 // pred_region
        %s117 = ssub.s32 %s9, 1
        // Predicated region
        $region13: #{_forward_jit.1} parent=11 // pred_check
          %p118 = pneg %p56
        $region14: #{_forward_jit.1} parent=11 // pred_check_branch
          %120 = sbr.rel (%p118) target = $region16
        $region15: #{_forward_jit.1} parent=11 // pred_region
          _
        $region16: #{_forward_jit.1} parent=11 // pred_fallthru
          _
        // Predicated region
        $region17: #{_forward_jit.1} parent=11 // pred_check
          %p121 = pneg %p77
        $region18: #{_forward_jit.1} parent=11 // pred_check_branch
          %123 = sbr.rel (%p121) target = $region20
        $region19: #{_forward_jit.1} parent=11 // pred_region
          _
        $region20: #{_forward_jit.1} parent=11 // pred_fallthru
          _
      $region12: #{_forward_jit.1} parent=5 // pred_fallthru
        _
      %p124 = scmp.lt.s32.totalorder %s9, 2
      // Predicated region
      $region21: #{_forward_jit.1} parent=5 // pred_check
        %p125 = pneg %p124
      $region22: #{_forward_jit.1} parent=5 // pred_check_branch
        %127 = sbr.rel (%p125) target = $region24
      $region23: #{_forward_jit.1} parent=5 // pred_region
        // Predicated region
        $region25: #{_forward_jit.1} parent=23 // pred_check
          %p128 = pneg %p29
        $region26: #{_forward_jit.1} parent=23 // pred_check_branch
          %130 = sbr.rel (%p128) target = $region28
        $region27: #{_forward_jit.1} parent=23 // pred_region
          %s131 = smul.u32 2, %s9
          %p132 = scmp.lt.s32.totalorder %s131, 3
          %s133 = scalar_select %p132, %s131, 3
          %s134 = smul.addr %s133, 4
          %s135 = scalar_lea.vmem %s0, %s134
          %s136 = smul.u32 2, %s9
        $region28: #{_forward_jit.1} parent=23 // pred_fallthru
          _
      $region24: #{_forward_jit.1} parent=5 // pred_fallthru
        _
      %p137 = scmp.le.s32.totalorder 1, %s9
      %p138 = scmp.lt.s32.totalorder %s9, 3
      %p139 = pnand %p137, %p138
      %p140 = pneg %p139
      // Predicated region
      $region29: #{_forward_jit.1} parent=5 // pred_check
        _
      $region30: #{_forward_jit.1} parent=5 // pred_check_branch
        %142 = sbr.rel (%p139) target = $region32
      $region31: #{_forward_jit.1} parent=5 // pred_region
        %s143 = ssub.s32 %s9, 1
        %s144 = smul.u32 2, %s14
        %p145 = scmp.lt.s32.totalorder %s144, 3
        %s146 = scalar_select %p145, %s144, 3
        %s147 = smul.addr %s146, 4
        %s148 = scalar_lea.vmem %s0, %s147
        %p149 = pneg %p35
        %p150 = pneg %p32
        %p151 = pneg %p56
        %p152 = pneg %p53
        %p153 = pneg %p77
        %p154 = pneg %p74
        %p155 = pneg %p103
        %p156 = pneg %p100
        %s157 = sand.u32 %s90, 1
        %s158 = sand.u32 %s90, 1
        %s159 = smul.addr %s158, 64
        %s160 = scalar_lea.vmem [#allocation3], %s159
        %s161 = smul.u32 2, %s14
        %p162 = scmp.lt.s32.totalorder %s161, 3
        %s163 = scalar_select %p162, %s161, 3
        %s164 = smul.addr %s163, 4
        %s165 = scalar_lea.vmem %s0, %s164
        %s166 = smul.u32 2, %s14
        %s167 = smul.u32 2, %s14
        %v168 = vld [vmem:[%s165] sm:$0x77]
        %v169 = vld [vmem:[%s2] sm:$0xff]
        %v170 = vld [vmem:[%s2 + $0x8] sm:$0xff]
        %v171 = vld [vmem:[%s2 + $0x10] sm:$0xff]
        %v172 = vld [vmem:[%s2 + $0x18] sm:$0xff]
        %v173 = vld [vmem:[%s2 + $0x20] sm:$0x1]
        %175 = vset.pattern.permute.xlu0 0
        %176 = vperm.xlu0 %175, %v169
        %v177 = vpop.permute.xlu0 %176
        %v180 = vlaneseq
        %v181 = vshrl.u32 %v180, 7
        %v182 = vsub.s32 0, %v181
        %v183 = vrot.slane %v168, %v182
        %v184 = vlaneseq
        %v185 = vshrl.u32 %v184, 7
        %v186 = vsub.s32 4, %v185
        %v187 = vrot.slane %v168, %v186
        %v190 = vlaneseq
        %v191 = vshrl.u32 %v190, 7
        %v192 = vsub.s32 0, %v191
        %v193 = vrot.slane %v183, %v192
        %v194 = vlaneseq
        %v195 = vshrl.u32 %v194, 7
        %v196 = vsub.s32 0, %v195
        %v197 = vrot.slane %v187, %v196
        %v198 = vmul.f32 %v177, %v193
        %v199 = vmul.f32 %v177, %v197
        %v200 = vlaneseq
        %v201 = vshrl.u32 %v200, 7
        %v202 = vsub.s32 1, %v201
        %v203 = vrot.slane %v168, %v202
        %v204 = vlaneseq
        %v205 = vshrl.u32 %v204, 7
        %v206 = vsub.s32 5, %v205
        %v207 = vrot.slane %v168, %v206
        %v210 = vlaneseq
        %v211 = vshrl.u32 %v210, 7
        %v212 = vsub.s32 1, %v211
        %v213 = vrot.slane %v203, %v212
        %v214 = vlaneseq
        %v215 = vshrl.u32 %v214, 7
        %v216 = vsub.s32 1, %v215
        %v217 = vrot.slane %v207, %v216
        %v218 = vmul.f32 %v177, %v213
        %v219 = vmul.f32 %v177, %v217
        %v220 = vlaneseq
        %v221 = vshrl.u32 %v220, 7
        %v222 = vsub.s32 2, %v221
        %v223 = vrot.slane %v168, %v222
        %v224 = vlaneseq
        %v225 = vshrl.u32 %v224, 7
        %v226 = vsub.s32 6, %v225
        %v227 = vrot.slane %v168, %v226
        %v230 = vlaneseq
        %v231 = vshrl.u32 %v230, 7
        %v232 = vsub.s32 2, %v231
        %v233 = vrot.slane %v223, %v232
        %v234 = vlaneseq
        %v235 = vshrl.u32 %v234, 7
        %v236 = vsub.s32 2, %v235
        %v237 = vrot.slane %v227, %v236
        %v238 = vmul.f32 %v177, %v233
        %v239 = vmul.f32 %v177, %v237
        %v240 = vand.u32 2147483647, %v198
        %vm241 = vcmp.le.f32.partialorder %v240, 0.7853982
        %vm242 = vcmp.lt.s32.totalorder %v198, 0
        %v243 = vand.u32 %v198, 2139095040
        %v244 = vshrl.u32 %v243, 23
        %v245 = vsub.s32 %v244, 127
        %v246 = vand.u32 2147483647, %v198
        %v247 = vand.u32 %v246, 8388607
        %v248 = vor.u32 %v247, 8388608
        %v249 = vsub.s32 0, %v248
        %v250 = vadd.s32 %v245, 1
        %vm251 = vcmp.gt.s32.totalorder %v250, 0
        %v252 = vsel %vm251, %v250, 0
        %v253 = vshrl.u32 %v252, 5
        %v254 = vand.u32 %v252, 31
        %v255 = vsub.s32 32, %v254
        %v256 = vshrl.u32 683565275, %v255
        %v257 = vshll.u32 683565275, %v254
        %v258 = vshrl.u32 2475754826, %v255
        %v259 = vor.u32 %v257, %v258
        %v260 = vshll.u32 2475754826, %v254
        %v261 = vshrl.u32 2131351028, %v255
        %v262 = vor.u32 %v260, %v261
        %v263 = vshll.u32 2131351028, %v254
        %v264 = vshrl.u32 2102212464, %v255
        %v265 = vor.u32 %v263, %v264
        %v266 = vshll.u32 2102212464, %v254
        %v267 = vshrl.u32 920167782, %v255
        %v268 = vor.u32 %v266, %v267
        %v269 = vshll.u32 920167782, %v254
        %v270 = vshrl.u32 1326507024, %v255
        %v271 = vor.u32 %v269, %v270
        %vm272 = vcmp.lt.s32.totalorder %v253, 1
        %vm273 = vcmp.lt.s32.totalorder %v253, 2
        %vm274 = vcmp.lt.s32.totalorder %v253, 3
        %vm275 = vcmp.lt.s32.totalorder %v253, 4
        %v276 = vsel %vm272, %v256, %v259
        %v277 = vsel %vm275, %v265, 2102212464
        %v278 = vsel %vm274, %v262, %v277
        %v279 = vsel %vm273, %v276, %v278
        %v280 = vsel %vm272, %v259, %v262
        %v281 = vsel %vm275, %v268, 920167782
        %v282 = vsel %vm274, %v265, %v281
        %v283 = vsel %vm273, %v280, %v282
        %v284 = vsel %vm272, %v262, %v265
        %v285 = vsel %vm275, %v271, 1326507024
        %v286 = vsel %vm274, %v268, %v285
        %v287 = vsel %vm273, %v284, %v286
        %v288 = vshll.u32 %v248, 8
        %v289 = vmul.u32.u64.compose %v288, %v287
        %v290 = vextract.low.u32 %v289
        %v291 = vextract.high.u32 %v289
        %v292 = vmul.u32.u64.compose %v288, %v283
        %v293 = vextract.low.u32 %v292
        %v294 = vextract.high.u32 %v292
        %v295 = vmul.u32 %v288, %v279
        %v296 = vadd.s32 %v291, %v293
        %vm297 = vc.u32 %v291, %v293
        %v298 = vadd.s32 %v294, 1
        %v299 = vsel %vm297, %v298, %v294
        %v300 = vadd.s32 %v295, %v299
        %v301 = vadd.s32 %v300, 536870912
        %v302 = vshrl.u32 %v301, 30
        %v303 = vshll.u32 %v302, 30
        %v304 = vsub.s32 %v300, %v303
        %vm305 = vcmp.lt.s32.totalorder %v304, 0
        %v306 = vsub.s32 0, %v304
        %v307 = vsel %vm305, %v306, %v304
        %v308 = vclz %v307
        %v309 = vsub.s32 %v308, 2
        %vm310 = vcmp.gt.s32.totalorder 0, %v309
        %v311 = vsel %vm310, 0, %v309
        %v312 = vsub.s32 32, %v311
        %v313 = vshll.u32 %v304, %v311
        %v314 = vshrl.u32 %v296, %v312
        %v315 = vor.u32 %v313, %v314
        %v316 = vsub.s32 4294967266, %v311
        %v317 = vadd.s32 %v316, 127
        %v318 = vshll.u32 %v317, 23
        %v319 = vor.u32 4788187, %v318
        %v320 = vand.u32 2147483647, %v319
        %v322 = vcvt.s32.f32 %v315
        %v323 = vmul.f32 %v322, %v320
        %v324 = vxor.u32 %v323, 2147483648
        %v325 = vsel %vm242, %v324, %v323
        %v326 = vsub.s32 4, %v302
        %v327 = vsel %vm242, %v326, %v302
        %v328 = vsel %vm241, %v198, %v325
        %v329 = vsel %vm241, 0, %v327
        %v330 = vcosq.f32.pop %v328
        %v331 = vsinq.f32.pop %v328
        %vm332 = vweird.f32 %v198
        %v333 = vadd.s32 %v329, 3
        %v334 = vand.u32 %v333, 3
        %vm335 = vcmp.lt.s32.totalorder %v334, 2
        %vm336 = vcmp.eq.s32.totalorder %v334, 0
        %v337 = vxor.u32 %v331, 2147483648
        %v338 = vsel %vm336, %v330, %v337
        %vm339 = vcmp.eq.s32.totalorder %v334, 2
        %v340 = vxor.u32 %v330, 2147483648
        %v341 = vsel %vm339, %v340, %v331
        %v342 = vsel %vm335, %v338, %v341
        %v343 = vsel %vm332, nan, %v342
        %v344 = vand.u32 2147483647, %v199
        %vm345 = vcmp.le.f32.partialorder %v344, 0.7853982
        %vm346 = vcmp.lt.s32.totalorder %v199, 0
        %v347 = vand.u32 %v199, 2139095040
        %v348 = vshrl.u32 %v347, 23
        %v349 = vsub.s32 %v348, 127
        %v350 = vand.u32 2147483647, %v199
        %v351 = vand.u32 %v350, 8388607
        %v352 = vor.u32 %v351, 8388608
        %v353 = vsub.s32 0, %v352
        %v354 = vadd.s32 %v349, 1
        %vm355 = vcmp.gt.s32.totalorder %v354, 0
        %v356 = vsel %vm355, %v354, 0
        %v357 = vshrl.u32 %v356, 5
        %v358 = vand.u32 %v356, 31
        %v359 = vsub.s32 32, %v358
        %v360 = vshrl.u32 683565275, %v359
        %v361 = vshll.u32 683565275, %v358
        %v362 = vshrl.u32 2475754826, %v359
        %v363 = vor.u32 %v361, %v362
        %v364 = vshll.u32 2475754826, %v358
        %v365 = vshrl.u32 2131351028, %v359
        %v366 = vor.u32 %v364, %v365
        %v367 = vshll.u32 2131351028, %v358
        %v368 = vshrl.u32 2102212464, %v359
        %v369 = vor.u32 %v367, %v368
        %v370 = vshll.u32 2102212464, %v358
        %v371 = vshrl.u32 920167782, %v359
        %v372 = vor.u32 %v370, %v371
        %v373 = vshll.u32 920167782, %v358
        %v374 = vshrl.u32 1326507024, %v359
        %v375 = vor.u32 %v373, %v374
        %vm376 = vcmp.lt.s32.totalorder %v357, 1
        %vm377 = vcmp.lt.s32.totalorder %v357, 2
        %vm378 = vcmp.lt.s32.totalorder %v357, 3
        %vm379 = vcmp.lt.s32.totalorder %v357, 4
        %v380 = vsel %vm376, %v360, %v363
        %v381 = vsel %vm379, %v369, 2102212464
        %v382 = vsel %vm378, %v366, %v381
        %v383 = vsel %vm377, %v380, %v382
        %v384 = vsel %vm376, %v363, %v366
        %v385 = vsel %vm379, %v372, 920167782
        %v386 = vsel %vm378, %v369, %v385
        %v387 = vsel %vm377, %v384, %v386
        %v388 = vsel %vm376, %v366, %v369
        %v389 = vsel %vm379, %v375, 1326507024
        %v390 = vsel %vm378, %v372, %v389
        %v391 = vsel %vm377, %v388, %v390
        %v392 = vshll.u32 %v352, 8
        %v393 = vmul.u32.u64.compose %v392, %v391
        %v394 = vextract.low.u32 %v393
        %v395 = vextract.high.u32 %v393
        %v396 = vmul.u32.u64.compose %v392, %v387
        %v397 = vextract.low.u32 %v396
        %v398 = vextract.high.u32 %v396
        %v399 = vmul.u32 %v392, %v383
        %v400 = vadd.s32 %v395, %v397
        %vm401 = vc.u32 %v395, %v397
        %v402 = vadd.s32 %v398, 1
        %v403 = vsel %vm401, %v402, %v398
        %v404 = vadd.s32 %v399, %v403
        %v405 = vadd.s32 %v404, 536870912
        %v406 = vshrl.u32 %v405, 30
        %v407 = vshll.u32 %v406, 30
        %v408 = vsub.s32 %v404, %v407
        %vm409 = vcmp.lt.s32.totalorder %v408, 0
        %v410 = vsub.s32 0, %v408
        %v411 = vsel %vm409, %v410, %v408
        %v412 = vclz %v411
        %v413 = vsub.s32 %v412, 2
        %vm414 = vcmp.gt.s32.totalorder 0, %v413
        %v415 = vsel %vm414, 0, %v413
        %v416 = vsub.s32 32, %v415
        %v417 = vshll.u32 %v408, %v415
        %v418 = vshrl.u32 %v400, %v416
        %v419 = vor.u32 %v417, %v418
        %v420 = vsub.s32 4294967266, %v415
        %v421 = vadd.s32 %v420, 127
        %v422 = vshll.u32 %v421, 23
        %v423 = vor.u32 4788187, %v422
        %v424 = vand.u32 2147483647, %v423
        %v426 = vcvt.s32.f32 %v419
        %v427 = vmul.f32 %v426, %v424
        %v428 = vxor.u32 %v427, 2147483648
        %v429 = vsel %vm346, %v428, %v427
        %v430 = vsub.s32 4, %v406
        %v431 = vsel %vm346, %v430, %v406
        %v432 = vsel %vm345, %v199, %v429
        %v433 = vsel %vm345, 0, %v431
        %v434 = vcosq.f32.pop %v432
        %v435 = vsinq.f32.pop %v432
        %vm436 = vweird.f32 %v199
        %v437 = vadd.s32 %v433, 3
        %v438 = vand.u32 %v437, 3
        %vm439 = vcmp.lt.s32.totalorder %v438, 2
        %vm440 = vcmp.eq.s32.totalorder %v438, 0
        %v441 = vxor.u32 %v435, 2147483648
        %v442 = vsel %vm440, %v434, %v441
        %vm443 = vcmp.eq.s32.totalorder %v438, 2
        %v444 = vxor.u32 %v434, 2147483648
        %v445 = vsel %vm443, %v444, %v435
        %v446 = vsel %vm439, %v442, %v445
        %v447 = vsel %vm436, nan, %v446
        %448 = vst [vmem:[#allocation2] sm:$0xff] %v343
        %449 = vst [vmem:[#allocation2 + $0x8] sm:$0xff] %v447
        %v450 = vand.u32 2147483647, %v218
        %vm451 = vcmp.le.f32.partialorder %v450, 0.7853982
        %vm452 = vcmp.lt.s32.totalorder %v218, 0
        %v453 = vand.u32 %v218, 2139095040
        %v454 = vshrl.u32 %v453, 23
        %v455 = vsub.s32 %v454, 127
        %v456 = vand.u32 2147483647, %v218
        %v457 = vand.u32 %v456, 8388607
        %v458 = vor.u32 %v457, 8388608
        %v459 = vsub.s32 0, %v458
        %v460 = vadd.s32 %v455, 1
        %vm461 = vcmp.gt.s32.totalorder %v460, 0
        %v462 = vsel %vm461, %v460, 0
        %v463 = vshrl.u32 %v462, 5
        %v464 = vand.u32 %v462, 31
        %v465 = vsub.s32 32, %v464
        %v466 = vshrl.u32 683565275, %v465
        %v467 = vshll.u32 683565275, %v464
        %v468 = vshrl.u32 2475754826, %v465
        %v469 = vor.u32 %v467, %v468
        %v470 = vshll.u32 2475754826, %v464
        %v471 = vshrl.u32 2131351028, %v465
        %v472 = vor.u32 %v470, %v471
        %v473 = vshll.u32 2131351028, %v464
        %v474 = vshrl.u32 2102212464, %v465
        %v475 = vor.u32 %v473, %v474
        %v476 = vshll.u32 2102212464, %v464
        %v477 = vshrl.u32 920167782, %v465
        %v478 = vor.u32 %v476, %v477
        %v479 = vshll.u32 920167782, %v464
        %v480 = vshrl.u32 1326507024, %v465
        %v481 = vor.u32 %v479, %v480
        %vm482 = vcmp.lt.s32.totalorder %v463, 1
        %vm483 = vcmp.lt.s32.totalorder %v463, 2
        %vm484 = vcmp.lt.s32.totalorder %v463, 3
        %vm485 = vcmp.lt.s32.totalorder %v463, 4
        %v486 = vsel %vm482, %v466, %v469
        %v487 = vsel %vm485, %v475, 2102212464
        %v488 = vsel %vm484, %v472, %v487
        %v489 = vsel %vm483, %v486, %v488
        %v490 = vsel %vm482, %v469, %v472
        %v491 = vsel %vm485, %v478, 920167782
        %v492 = vsel %vm484, %v475, %v491
        %v493 = vsel %vm483, %v490, %v492
        %v494 = vsel %vm482, %v472, %v475
        %v495 = vsel %vm485, %v481, 1326507024
        %v496 = vsel %vm484, %v478, %v495
        %v497 = vsel %vm483, %v494, %v496
        %v498 = vshll.u32 %v458, 8
        %v499 = vmul.u32.u64.compose %v498, %v497
        %v500 = vextract.low.u32 %v499
        %v501 = vextract.high.u32 %v499
        %v502 = vmul.u32.u64.compose %v498, %v493
        %v503 = vextract.low.u32 %v502
        %v504 = vextract.high.u32 %v502
        %v505 = vmul.u32 %v498, %v489
        %v506 = vadd.s32 %v501, %v503
        %vm507 = vc.u32 %v501, %v503
        %v508 = vadd.s32 %v504, 1
        %v509 = vsel %vm507, %v508, %v504
        %v510 = vadd.s32 %v505, %v509
        %v511 = vadd.s32 %v510, 536870912
        %v512 = vshrl.u32 %v511, 30
        %v513 = vshll.u32 %v512, 30
        %v514 = vsub.s32 %v510, %v513
        %vm515 = vcmp.lt.s32.totalorder %v514, 0
        %v516 = vsub.s32 0, %v514
        %v517 = vsel %vm515, %v516, %v514
        %v518 = vclz %v517
        %v519 = vsub.s32 %v518, 2
        %vm520 = vcmp.gt.s32.totalorder 0, %v519
        %v521 = vsel %vm520, 0, %v519
        %v522 = vsub.s32 32, %v521
        %v523 = vshll.u32 %v514, %v521
        %v524 = vshrl.u32 %v506, %v522
        %v525 = vor.u32 %v523, %v524
        %v526 = vsub.s32 4294967266, %v521
        %v527 = vadd.s32 %v526, 127
        %v528 = vshll.u32 %v527, 23
        %v529 = vor.u32 4788187, %v528
        %v530 = vand.u32 2147483647, %v529
        %v532 = vcvt.s32.f32 %v525
        %v533 = vmul.f32 %v532, %v530
        %v534 = vxor.u32 %v533, 2147483648
        %v535 = vsel %vm452, %v534, %v533
        %v536 = vsub.s32 4, %v512
        %v537 = vsel %vm452, %v536, %v512
        %v538 = vsel %vm451, %v218, %v535
        %v539 = vsel %vm451, 0, %v537
        %v540 = vcosq.f32.pop %v538
        %v541 = vsinq.f32.pop %v538
        %vm542 = vweird.f32 %v218
        %v543 = vadd.s32 %v539, 3
        %v544 = vand.u32 %v543, 3
        %vm545 = vcmp.lt.s32.totalorder %v544, 2
        %vm546 = vcmp.eq.s32.totalorder %v544, 0
        %v547 = vxor.u32 %v541, 2147483648
        %v548 = vsel %vm546, %v540, %v547
        %vm549 = vcmp.eq.s32.totalorder %v544, 2
        %v550 = vxor.u32 %v540, 2147483648
        %v551 = vsel %vm549, %v550, %v541
        %v552 = vsel %vm545, %v548, %v551
        %v553 = vsel %vm542, nan, %v552
        %v554 = vand.u32 2147483647, %v219
        %vm555 = vcmp.le.f32.partialorder %v554, 0.7853982
        %vm556 = vcmp.lt.s32.totalorder %v219, 0
        %v557 = vand.u32 %v219, 2139095040
        %v558 = vshrl.u32 %v557, 23
        %v559 = vsub.s32 %v558, 127
        %v560 = vand.u32 2147483647, %v219
        %v561 = vand.u32 %v560, 8388607
        %v562 = vor.u32 %v561, 8388608
        %v563 = vsub.s32 0, %v562
        %v564 = vadd.s32 %v559, 1
        %vm565 = vcmp.gt.s32.totalorder %v564, 0
        %v566 = vsel %vm565, %v564, 0
        %v567 = vshrl.u32 %v566, 5
        %v568 = vand.u32 %v566, 31
        %v569 = vsub.s32 32, %v568
        %v570 = vshrl.u32 683565275, %v569
        %v571 = vshll.u32 683565275, %v568
        %v572 = vshrl.u32 2475754826, %v569
        %v573 = vor.u32 %v571, %v572
        %v574 = vshll.u32 2475754826, %v568
        %v575 = vshrl.u32 2131351028, %v569
        %v576 = vor.u32 %v574, %v575
        %v577 = vshll.u32 2131351028, %v568
        %v578 = vshrl.u32 2102212464, %v569
        %v579 = vor.u32 %v577, %v578
        %v580 = vshll.u32 2102212464, %v568
        %v581 = vshrl.u32 920167782, %v569
        %v582 = vor.u32 %v580, %v581
        %v583 = vshll.u32 920167782, %v568
        %v584 = vshrl.u32 1326507024, %v569
        %v585 = vor.u32 %v583, %v584
        %vm586 = vcmp.lt.s32.totalorder %v567, 1
        %vm587 = vcmp.lt.s32.totalorder %v567, 2
        %vm588 = vcmp.lt.s32.totalorder %v567, 3
        %vm589 = vcmp.lt.s32.totalorder %v567, 4
        %v590 = vsel %vm586, %v570, %v573
        %v591 = vsel %vm589, %v579, 2102212464
        %v592 = vsel %vm588, %v576, %v591
        %v593 = vsel %vm587, %v590, %v592
        %v594 = vsel %vm586, %v573, %v576
        %v595 = vsel %vm589, %v582, 920167782
        %v596 = vsel %vm588, %v579, %v595
        %v597 = vsel %vm587, %v594, %v596
        %v598 = vsel %vm586, %v576, %v579
        %v599 = vsel %vm589, %v585, 1326507024
        %v600 = vsel %vm588, %v582, %v599
        %v601 = vsel %vm587, %v598, %v600
        %v602 = vshll.u32 %v562, 8
        %v603 = vmul.u32.u64.compose %v602, %v601
        %v604 = vextract.low.u32 %v603
        %v605 = vextract.high.u32 %v603
        %v606 = vmul.u32.u64.compose %v602, %v597
        %v607 = vextract.low.u32 %v606
        %v608 = vextract.high.u32 %v606
        %v609 = vmul.u32 %v602, %v593
        %v610 = vadd.s32 %v605, %v607
        %vm611 = vc.u32 %v605, %v607
        %v612 = vadd.s32 %v608, 1
        %v613 = vsel %vm611, %v612, %v608
        %v614 = vadd.s32 %v609, %v613
        %v615 = vadd.s32 %v614, 536870912
        %v616 = vshrl.u32 %v615, 30
        %v617 = vshll.u32 %v616, 30
        %v618 = vsub.s32 %v614, %v617
        %vm619 = vcmp.lt.s32.totalorder %v618, 0
        %v620 = vsub.s32 0, %v618
        %v621 = vsel %vm619, %v620, %v618
        %v622 = vclz %v621
        %v623 = vsub.s32 %v622, 2
        %vm624 = vcmp.gt.s32.totalorder 0, %v623
        %v625 = vsel %vm624, 0, %v623
        %v626 = vsub.s32 32, %v625
        %v627 = vshll.u32 %v618, %v625
        %v628 = vshrl.u32 %v610, %v626
        %v629 = vor.u32 %v627, %v628
        %v630 = vsub.s32 4294967266, %v625
        %v631 = vadd.s32 %v630, 127
        %v632 = vshll.u32 %v631, 23
        %v633 = vor.u32 4788187, %v632
        %v634 = vand.u32 2147483647, %v633
        %v636 = vcvt.s32.f32 %v629
        %v637 = vmul.f32 %v636, %v634
        %v638 = vxor.u32 %v637, 2147483648
        %v639 = vsel %vm556, %v638, %v637
        %v640 = vsub.s32 4, %v616
        %v641 = vsel %vm556, %v640, %v616
        %v642 = vsel %vm555, %v219, %v639
        %v643 = vsel %vm555, 0, %v641
        %v644 = vcosq.f32.pop %v642
        %v645 = vsinq.f32.pop %v642
        %vm646 = vweird.f32 %v219
        %v647 = vadd.s32 %v643, 3
        %v648 = vand.u32 %v647, 3
        %vm649 = vcmp.lt.s32.totalorder %v648, 2
        %vm650 = vcmp.eq.s32.totalorder %v648, 0
        %v651 = vxor.u32 %v645, 2147483648
        %v652 = vsel %vm650, %v644, %v651
        %vm653 = vcmp.eq.s32.totalorder %v648, 2
        %v654 = vxor.u32 %v644, 2147483648
        %v655 = vsel %vm653, %v654, %v645
        %v656 = vsel %vm649, %v652, %v655
        %v657 = vsel %vm646, nan, %v656
        %658 = vst [vmem:[#allocation2 + $0x10] sm:$0xff] %v553
        %659 = vst [vmem:[#allocation2 + $0x18] sm:$0xff] %v657
        %v660 = vand.u32 2147483647, %v238
        %vm661 = vcmp.le.f32.partialorder %v660, 0.7853982
        %vm662 = vcmp.lt.s32.totalorder %v238, 0
        %v663 = vand.u32 %v238, 2139095040
        %v664 = vshrl.u32 %v663, 23
        %v665 = vsub.s32 %v664, 127
        %v666 = vand.u32 2147483647, %v238
        %v667 = vand.u32 %v666, 8388607
        %v668 = vor.u32 %v667, 8388608
        %v669 = vsub.s32 0, %v668
        %v670 = vadd.s32 %v665, 1
        %vm671 = vcmp.gt.s32.totalorder %v670, 0
        %v672 = vsel %vm671, %v670, 0
        %v673 = vshrl.u32 %v672, 5
        %v674 = vand.u32 %v672, 31
        %v675 = vsub.s32 32, %v674
        %v676 = vshrl.u32 683565275, %v675
        %v677 = vshll.u32 683565275, %v674
        %v678 = vshrl.u32 2475754826, %v675
        %v679 = vor.u32 %v677, %v678
        %v680 = vshll.u32 2475754826, %v674
        %v681 = vshrl.u32 2131351028, %v675
        %v682 = vor.u32 %v680, %v681
        %v683 = vshll.u32 2131351028, %v674
        %v684 = vshrl.u32 2102212464, %v675
        %v685 = vor.u32 %v683, %v684
        %v686 = vshll.u32 2102212464, %v674
        %v687 = vshrl.u32 920167782, %v675
        %v688 = vor.u32 %v686, %v687
        %v689 = vshll.u32 920167782, %v674
        %v690 = vshrl.u32 1326507024, %v675
        %v691 = vor.u32 %v689, %v690
        %vm692 = vcmp.lt.s32.totalorder %v673, 1
        %vm693 = vcmp.lt.s32.totalorder %v673, 2
        %vm694 = vcmp.lt.s32.totalorder %v673, 3
        %vm695 = vcmp.lt.s32.totalorder %v673, 4
        %v696 = vsel %vm692, %v676, %v679
        %v697 = vsel %vm695, %v685, 2102212464
        %v698 = vsel %vm694, %v682, %v697
        %v699 = vsel %vm693, %v696, %v698
        %v700 = vsel %vm692, %v679, %v682
        %v701 = vsel %vm695, %v688, 920167782
        %v702 = vsel %vm694, %v685, %v701
        %v703 = vsel %vm693, %v700, %v702
        %v704 = vsel %vm692, %v682, %v685
        %v705 = vsel %vm695, %v691, 1326507024
        %v706 = vsel %vm694, %v688, %v705
        %v707 = vsel %vm693, %v704, %v706
        %v708 = vshll.u32 %v668, 8
        %v709 = vmul.u32.u64.compose %v708, %v707
        %v710 = vextract.low.u32 %v709
        %v711 = vextract.high.u32 %v709
        %v712 = vmul.u32.u64.compose %v708, %v703
        %v713 = vextract.low.u32 %v712
        %v714 = vextract.high.u32 %v712
        %v715 = vmul.u32 %v708, %v699
        %v716 = vadd.s32 %v711, %v713
        %vm717 = vc.u32 %v711, %v713
        %v718 = vadd.s32 %v714, 1
        %v719 = vsel %vm717, %v718, %v714
        %v720 = vadd.s32 %v715, %v719
        %v721 = vadd.s32 %v720, 536870912
        %v722 = vshrl.u32 %v721, 30
        %v723 = vshll.u32 %v722, 30
        %v724 = vsub.s32 %v720, %v723
        %vm725 = vcmp.lt.s32.totalorder %v724, 0
        %v726 = vsub.s32 0, %v724
        %v727 = vsel %vm725, %v726, %v724
        %v728 = vclz %v727
        %v729 = vsub.s32 %v728, 2
        %vm730 = vcmp.gt.s32.totalorder 0, %v729
        %v731 = vsel %vm730, 0, %v729
        %v732 = vsub.s32 32, %v731
        %v733 = vshll.u32 %v724, %v731
        %v734 = vshrl.u32 %v716, %v732
        %v735 = vor.u32 %v733, %v734
        %v736 = vsub.s32 4294967266, %v731
        %v737 = vadd.s32 %v736, 127
        %v738 = vshll.u32 %v737, 23
        %v739 = vor.u32 4788187, %v738
        %v740 = vand.u32 2147483647, %v739
        %v742 = vcvt.s32.f32 %v735
        %v743 = vmul.f32 %v742, %v740
        %v744 = vxor.u32 %v743, 2147483648
        %v745 = vsel %vm662, %v744, %v743
        %v746 = vsub.s32 4, %v722
        %v747 = vsel %vm662, %v746, %v722
        %v748 = vsel %vm661, %v238, %v745
        %v749 = vsel %vm661, 0, %v747
        %v750 = vcosq.f32.pop %v748
        %v751 = vsinq.f32.pop %v748
        %vm752 = vweird.f32 %v238
        %v753 = vadd.s32 %v749, 3
        %v754 = vand.u32 %v753, 3
        %vm755 = vcmp.lt.s32.totalorder %v754, 2
        %vm756 = vcmp.eq.s32.totalorder %v754, 0
        %v757 = vxor.u32 %v751, 2147483648
        %v758 = vsel %vm756, %v750, %v757
        %vm759 = vcmp.eq.s32.totalorder %v754, 2
        %v760 = vxor.u32 %v750, 2147483648
        %v761 = vsel %vm759, %v760, %v751
        %v762 = vsel %vm755, %v758, %v761
        %v763 = vsel %vm752, nan, %v762
        %v764 = vand.u32 2147483647, %v239
        %vm765 = vcmp.le.f32.partialorder %v764, 0.7853982
        %vm766 = vcmp.lt.s32.totalorder %v239, 0
        %v767 = vand.u32 %v239, 2139095040
        %v768 = vshrl.u32 %v767, 23
        %v769 = vsub.s32 %v768, 127
        %v770 = vand.u32 2147483647, %v239
        %v771 = vand.u32 %v770, 8388607
        %v772 = vor.u32 %v771, 8388608
        %v773 = vsub.s32 0, %v772
        %v774 = vadd.s32 %v769, 1
        %vm775 = vcmp.gt.s32.totalorder %v774, 0
        %v776 = vsel %vm775, %v774, 0
        %v777 = vshrl.u32 %v776, 5
        %v778 = vand.u32 %v776, 31
        %v779 = vsub.s32 32, %v778
        %v780 = vshrl.u32 683565275, %v779
        %v781 = vshll.u32 683565275, %v778
        %v782 = vshrl.u32 2475754826, %v779
        %v783 = vor.u32 %v781, %v782
        %v784 = vshll.u32 2475754826, %v778
        %v785 = vshrl.u32 2131351028, %v779
        %v786 = vor.u32 %v784, %v785
        %v787 = vshll.u32 2131351028, %v778
        %v788 = vshrl.u32 2102212464, %v779
        %v789 = vor.u32 %v787, %v788
        %v790 = vshll.u32 2102212464, %v778
        %v791 = vshrl.u32 920167782, %v779
        %v792 = vor.u32 %v790, %v791
        %v793 = vshll.u32 920167782, %v778
        %v794 = vshrl.u32 1326507024, %v779
        %v795 = vor.u32 %v793, %v794
        %vm796 = vcmp.lt.s32.totalorder %v777, 1
        %vm797 = vcmp.lt.s32.totalorder %v777, 2
        %vm798 = vcmp.lt.s32.totalorder %v777, 3
        %vm799 = vcmp.lt.s32.totalorder %v777, 4
        %v800 = vsel %vm796, %v780, %v783
        %v801 = vsel %vm799, %v789, 2102212464
        %v802 = vsel %vm798, %v786, %v801
        %v803 = vsel %vm797, %v800, %v802
        %v804 = vsel %vm796, %v783, %v786
        %v805 = vsel %vm799, %v792, 920167782
        %v806 = vsel %vm798, %v789, %v805
        %v807 = vsel %vm797, %v804, %v806
        %v808 = vsel %vm796, %v786, %v789
        %v809 = vsel %vm799, %v795, 1326507024
        %v810 = vsel %vm798, %v792, %v809
        %v811 = vsel %vm797, %v808, %v810
        %v812 = vshll.u32 %v772, 8
        %v813 = vmul.u32.u64.compose %v812, %v811
        %v814 = vextract.low.u32 %v813
        %v815 = vextract.high.u32 %v813
        %v816 = vmul.u32.u64.compose %v812, %v807
        %v817 = vextract.low.u32 %v816
        %v818 = vextract.high.u32 %v816
        %v819 = vmul.u32 %v812, %v803
        %v820 = vadd.s32 %v815, %v817
        %vm821 = vc.u32 %v815, %v817
        %v822 = vadd.s32 %v818, 1
        %v823 = vsel %vm821, %v822, %v818
        %v824 = vadd.s32 %v819, %v823
        %v825 = vadd.s32 %v824, 536870912
        %v826 = vshrl.u32 %v825, 30
        %v827 = vshll.u32 %v826, 30
        %v828 = vsub.s32 %v824, %v827
        %vm829 = vcmp.lt.s32.totalorder %v828, 0
        %v830 = vsub.s32 0, %v828
        %v831 = vsel %vm829, %v830, %v828
        %v832 = vclz %v831
        %v833 = vsub.s32 %v832, 2
        %vm834 = vcmp.gt.s32.totalorder 0, %v833
        %v835 = vsel %vm834, 0, %v833
        %v836 = vsub.s32 32, %v835
        %v837 = vshll.u32 %v828, %v835
        %v838 = vshrl.u32 %v820, %v836
        %v839 = vor.u32 %v837, %v838
        %v840 = vsub.s32 4294967266, %v835
        %v841 = vadd.s32 %v840, 127
        %v842 = vshll.u32 %v841, 23
        %v843 = vor.u32 4788187, %v842
        %v844 = vand.u32 2147483647, %v843
        %v846 = vcvt.s32.f32 %v839
        %v847 = vmul.f32 %v846, %v844
        %v848 = vxor.u32 %v847, 2147483648
        %v849 = vsel %vm766, %v848, %v847
        %v850 = vsub.s32 4, %v826
        %v851 = vsel %vm766, %v850, %v826
        %v852 = vsel %vm765, %v239, %v849
        %v853 = vsel %vm765, 0, %v851
        %v854 = vcosq.f32.pop %v852
        %v855 = vsinq.f32.pop %v852
        %vm856 = vweird.f32 %v239
        %v857 = vadd.s32 %v853, 3
        %v858 = vand.u32 %v857, 3
        %vm859 = vcmp.lt.s32.totalorder %v858, 2
        %vm860 = vcmp.eq.s32.totalorder %v858, 0
        %v861 = vxor.u32 %v855, 2147483648
        %v862 = vsel %vm860, %v854, %v861
        %vm863 = vcmp.eq.s32.totalorder %v858, 2
        %v864 = vxor.u32 %v854, 2147483648
        %v865 = vsel %vm863, %v864, %v855
        %v866 = vsel %vm859, %v862, %v865
        %v867 = vsel %vm856, nan, %v866
        %868 = vst [vmem:[#allocation2 + $0x20] sm:$0xff] %v763
        %869 = vst [vmem:[#allocation2 + $0x28] sm:$0xff] %v867
        %v870 = vadd.f32 %v198, 1.5707964
        %v871 = vadd.f32 %v199, 1.5707964
        %v872 = vand.u32 2147483647, %v870
        %vm873 = vcmp.le.f32.partialorder %v872, 0.7853982
        %vm874 = vcmp.lt.s32.totalorder %v870, 0
        %v875 = vand.u32 %v870, 2139095040
        %v876 = vshrl.u32 %v875, 23
        %v877 = vsub.s32 %v876, 127
        %v878 = vand.u32 2147483647, %v870
        %v879 = vand.u32 %v878, 8388607
        %v880 = vor.u32 %v879, 8388608
        %v881 = vsub.s32 0, %v880
        %v882 = vadd.s32 %v877, 1
        %vm883 = vcmp.gt.s32.totalorder %v882, 0
        %v884 = vsel %vm883, %v882, 0
        %v885 = vshrl.u32 %v884, 5
        %v886 = vand.u32 %v884, 31
        %v887 = vsub.s32 32, %v886
        %v888 = vshrl.u32 683565275, %v887
        %v889 = vshll.u32 683565275, %v886
        %v890 = vshrl.u32 2475754826, %v887
        %v891 = vor.u32 %v889, %v890
        %v892 = vshll.u32 2475754826, %v886
        %v893 = vshrl.u32 2131351028, %v887
        %v894 = vor.u32 %v892, %v893
        %v895 = vshll.u32 2131351028, %v886
        %v896 = vshrl.u32 2102212464, %v887
        %v897 = vor.u32 %v895, %v896
        %v898 = vshll.u32 2102212464, %v886
        %v899 = vshrl.u32 920167782, %v887
        %v900 = vor.u32 %v898, %v899
        %v901 = vshll.u32 920167782, %v886
        %v902 = vshrl.u32 1326507024, %v887
        %v903 = vor.u32 %v901, %v902
        %vm904 = vcmp.lt.s32.totalorder %v885, 1
        %vm905 = vcmp.lt.s32.totalorder %v885, 2
        %vm906 = vcmp.lt.s32.totalorder %v885, 3
        %vm907 = vcmp.lt.s32.totalorder %v885, 4
        %v908 = vsel %vm904, %v888, %v891
        %v909 = vsel %vm907, %v897, 2102212464
        %v910 = vsel %vm906, %v894, %v909
        %v911 = vsel %vm905, %v908, %v910
        %v912 = vsel %vm904, %v891, %v894
        %v913 = vsel %vm907, %v900, 920167782
        %v914 = vsel %vm906, %v897, %v913
        %v915 = vsel %vm905, %v912, %v914
        %v916 = vsel %vm904, %v894, %v897
        %v917 = vsel %vm907, %v903, 1326507024
        %v918 = vsel %vm906, %v900, %v917
        %v919 = vsel %vm905, %v916, %v918
        %v920 = vshll.u32 %v880, 8
        %v921 = vmul.u32.u64.compose %v920, %v919
        %v922 = vextract.low.u32 %v921
        %v923 = vextract.high.u32 %v921
        %v924 = vmul.u32.u64.compose %v920, %v915
        %v925 = vextract.low.u32 %v924
        %v926 = vextract.high.u32 %v924
        %v927 = vmul.u32 %v920, %v911
        %v928 = vadd.s32 %v923, %v925
        %vm929 = vc.u32 %v923, %v925
        %v930 = vadd.s32 %v926, 1
        %v931 = vsel %vm929, %v930, %v926
        %v932 = vadd.s32 %v927, %v931
        %v933 = vadd.s32 %v932, 536870912
        %v934 = vshrl.u32 %v933, 30
        %v935 = vshll.u32 %v934, 30
        %v936 = vsub.s32 %v932, %v935
        %vm937 = vcmp.lt.s32.totalorder %v936, 0
        %v938 = vsub.s32 0, %v936
        %v939 = vsel %vm937, %v938, %v936
        %v940 = vclz %v939
        %v941 = vsub.s32 %v940, 2
        %vm942 = vcmp.gt.s32.totalorder 0, %v941
        %v943 = vsel %vm942, 0, %v941
        %v944 = vsub.s32 32, %v943
        %v945 = vshll.u32 %v936, %v943
        %v946 = vshrl.u32 %v928, %v944
        %v947 = vor.u32 %v945, %v946
        %v948 = vsub.s32 4294967266, %v943
        %v949 = vadd.s32 %v948, 127
        %v950 = vshll.u32 %v949, 23
        %v951 = vor.u32 4788187, %v950
        %v952 = vand.u32 2147483647, %v951
        %v954 = vcvt.s32.f32 %v947
        %v955 = vmul.f32 %v954, %v952
        %v956 = vxor.u32 %v955, 2147483648
        %v957 = vsel %vm874, %v956, %v955
        %v958 = vsub.s32 4, %v934
        %v959 = vsel %vm874, %v958, %v934
        %v960 = vsel %vm873, %v870, %v957
        %v961 = vsel %vm873, 0, %v959
        %v962 = vcosq.f32.pop %v960
        %v963 = vsinq.f32.pop %v960
        %vm964 = vweird.f32 %v870
        %v965 = vadd.s32 %v961, 3
        %v966 = vand.u32 %v965, 3
        %vm967 = vcmp.lt.s32.totalorder %v966, 2
        %vm968 = vcmp.eq.s32.totalorder %v966, 0
        %v969 = vxor.u32 %v963, 2147483648
        %v970 = vsel %vm968, %v962, %v969
        %vm971 = vcmp.eq.s32.totalorder %v966, 2
        %v972 = vxor.u32 %v962, 2147483648
        %v973 = vsel %vm971, %v972, %v963
        %v974 = vsel %vm967, %v970, %v973
        %v975 = vsel %vm964, nan, %v974
        %v976 = vand.u32 2147483647, %v871
        %vm977 = vcmp.le.f32.partialorder %v976, 0.7853982
        %vm978 = vcmp.lt.s32.totalorder %v871, 0
        %v979 = vand.u32 %v871, 2139095040
        %v980 = vshrl.u32 %v979, 23
        %v981 = vsub.s32 %v980, 127
        %v982 = vand.u32 2147483647, %v871
        %v983 = vand.u32 %v982, 8388607
        %v984 = vor.u32 %v983, 8388608
        %v985 = vsub.s32 0, %v984
        %v986 = vadd.s32 %v981, 1
        %vm987 = vcmp.gt.s32.totalorder %v986, 0
        %v988 = vsel %vm987, %v986, 0
        %v989 = vshrl.u32 %v988, 5
        %v990 = vand.u32 %v988, 31
        %v991 = vsub.s32 32, %v990
        %v992 = vshrl.u32 683565275, %v991
        %v993 = vshll.u32 683565275, %v990
        %v994 = vshrl.u32 2475754826, %v991
        %v995 = vor.u32 %v993, %v994
        %v996 = vshll.u32 2475754826, %v990
        %v997 = vshrl.u32 2131351028, %v991
        %v998 = vor.u32 %v996, %v997
        %v999 = vshll.u32 2131351028, %v990
        %v1000 = vshrl.u32 2102212464, %v991
        %v1001 = vor.u32 %v999, %v1000
        %v1002 = vshll.u32 2102212464, %v990
        %v1003 = vshrl.u32 920167782, %v991
        %v1004 = vor.u32 %v1002, %v1003
        %v1005 = vshll.u32 920167782, %v990
        %v1006 = vshrl.u32 1326507024, %v991
        %v1007 = vor.u32 %v1005, %v1006
        %vm1008 = vcmp.lt.s32.totalorder %v989, 1
        %vm1009 = vcmp.lt.s32.totalorder %v989, 2
        %vm1010 = vcmp.lt.s32.totalorder %v989, 3
        %vm1011 = vcmp.lt.s32.totalorder %v989, 4
        %v1012 = vsel %vm1008, %v992, %v995
        %v1013 = vsel %vm1011, %v1001, 2102212464
        %v1014 = vsel %vm1010, %v998, %v1013
        %v1015 = vsel %vm1009, %v1012, %v1014
        %v1016 = vsel %vm1008, %v995, %v998
        %v1017 = vsel %vm1011, %v1004, 920167782
        %v1018 = vsel %vm1010, %v1001, %v1017
        %v1019 = vsel %vm1009, %v1016, %v1018
        %v1020 = vsel %vm1008, %v998, %v1001
        %v1021 = vsel %vm1011, %v1007, 1326507024
        %v1022 = vsel %vm1010, %v1004, %v1021
        %v1023 = vsel %vm1009, %v1020, %v1022
        %v1024 = vshll.u32 %v984, 8
        %v1025 = vmul.u32.u64.compose %v1024, %v1023
        %v1026 = vextract.low.u32 %v1025
        %v1027 = vextract.high.u32 %v1025
        %v1028 = vmul.u32.u64.compose %v1024, %v1019
        %v1029 = vextract.low.u32 %v1028
        %v1030 = vextract.high.u32 %v1028
        %v1031 = vmul.u32 %v1024, %v1015
        %v1032 = vadd.s32 %v1027, %v1029
        %vm1033 = vc.u32 %v1027, %v1029
        %v1034 = vadd.s32 %v1030, 1
        %v1035 = vsel %vm1033, %v1034, %v1030
        %v1036 = vadd.s32 %v1031, %v1035
        %v1037 = vadd.s32 %v1036, 536870912
        %v1038 = vshrl.u32 %v1037, 30
        %v1039 = vshll.u32 %v1038, 30
        %v1040 = vsub.s32 %v1036, %v1039
        %vm1041 = vcmp.lt.s32.totalorder %v1040, 0
        %v1042 = vsub.s32 0, %v1040
        %v1043 = vsel %vm1041, %v1042, %v1040
        %v1044 = vclz %v1043
        %v1045 = vsub.s32 %v1044, 2
        %vm1046 = vcmp.gt.s32.totalorder 0, %v1045
        %v1047 = vsel %vm1046, 0, %v1045
        %v1048 = vsub.s32 32, %v1047
        %v1049 = vshll.u32 %v1040, %v1047
        %v1050 = vshrl.u32 %v1032, %v1048
        %v1051 = vor.u32 %v1049, %v1050
        %v1052 = vsub.s32 4294967266, %v1047
        %v1053 = vadd.s32 %v1052, 127
        %v1054 = vshll.u32 %v1053, 23
        %v1055 = vor.u32 4788187, %v1054
        %v1056 = vand.u32 2147483647, %v1055
        %v1058 = vcvt.s32.f32 %v1051
        %v1059 = vmul.f32 %v1058, %v1056
        %v1060 = vxor.u32 %v1059, 2147483648
        %v1061 = vsel %vm978, %v1060, %v1059
        %v1062 = vsub.s32 4, %v1038
        %v1063 = vsel %vm978, %v1062, %v1038
        %v1064 = vsel %vm977, %v871, %v1061
        %v1065 = vsel %vm977, 0, %v1063
        %v1066 = vcosq.f32.pop %v1064
        %v1067 = vsinq.f32.pop %v1064
        %vm1068 = vweird.f32 %v871
        %v1069 = vadd.s32 %v1065, 3
        %v1070 = vand.u32 %v1069, 3
        %vm1071 = vcmp.lt.s32.totalorder %v1070, 2
        %vm1072 = vcmp.eq.s32.totalorder %v1070, 0
        %v1073 = vxor.u32 %v1067, 2147483648
        %v1074 = vsel %vm1072, %v1066, %v1073
        %vm1075 = vcmp.eq.s32.totalorder %v1070, 2
        %v1076 = vxor.u32 %v1066, 2147483648
        %v1077 = vsel %vm1075, %v1076, %v1067
        %v1078 = vsel %vm1071, %v1074, %v1077
        %v1079 = vsel %vm1068, nan, %v1078
        %1080 = vst [vmem:[#allocation2 + $0x30] sm:$0xff] %v975
        %1081 = vst [vmem:[#allocation2 + $0x38] sm:$0xff] %v1079
        %v1082 = vadd.f32 %v218, 1.5707964
        %v1083 = vadd.f32 %v219, 1.5707964
        %v1084 = vand.u32 2147483647, %v1082
        %vm1085 = vcmp.le.f32.partialorder %v1084, 0.7853982
        %vm1086 = vcmp.lt.s32.totalorder %v1082, 0
        %v1087 = vand.u32 %v1082, 2139095040
        %v1088 = vshrl.u32 %v1087, 23
        %v1089 = vsub.s32 %v1088, 127
        %v1090 = vand.u32 2147483647, %v1082
        %v1091 = vand.u32 %v1090, 8388607
        %v1092 = vor.u32 %v1091, 8388608
        %v1093 = vsub.s32 0, %v1092
        %v1094 = vadd.s32 %v1089, 1
        %vm1095 = vcmp.gt.s32.totalorder %v1094, 0
        %v1096 = vsel %vm1095, %v1094, 0
        %v1097 = vshrl.u32 %v1096, 5
        %v1098 = vand.u32 %v1096, 31
        %v1099 = vsub.s32 32, %v1098
        %v1100 = vshrl.u32 683565275, %v1099
        %v1101 = vshll.u32 683565275, %v1098
        %v1102 = vshrl.u32 2475754826, %v1099
        %v1103 = vor.u32 %v1101, %v1102
        %v1104 = vshll.u32 2475754826, %v1098
        %v1105 = vshrl.u32 2131351028, %v1099
        %v1106 = vor.u32 %v1104, %v1105
        %v1107 = vshll.u32 2131351028, %v1098
        %v1108 = vshrl.u32 2102212464, %v1099
        %v1109 = vor.u32 %v1107, %v1108
        %v1110 = vshll.u32 2102212464, %v1098
        %v1111 = vshrl.u32 920167782, %v1099
        %v1112 = vor.u32 %v1110, %v1111
        %v1113 = vshll.u32 920167782, %v1098
        %v1114 = vshrl.u32 1326507024, %v1099
        %v1115 = vor.u32 %v1113, %v1114
        %vm1116 = vcmp.lt.s32.totalorder %v1097, 1
        %vm1117 = vcmp.lt.s32.totalorder %v1097, 2
        %vm1118 = vcmp.lt.s32.totalorder %v1097, 3
        %vm1119 = vcmp.lt.s32.totalorder %v1097, 4
        %v1120 = vsel %vm1116, %v1100, %v1103
        %v1121 = vsel %vm1119, %v1109, 2102212464
        %v1122 = vsel %vm1118, %v1106, %v1121
        %v1123 = vsel %vm1117, %v1120, %v1122
        %v1124 = vsel %vm1116, %v1103, %v1106
        %v1125 = vsel %vm1119, %v1112, 920167782
        %v1126 = vsel %vm1118, %v1109, %v1125
        %v1127 = vsel %vm1117, %v1124, %v1126
        %v1128 = vsel %vm1116, %v1106, %v1109
        %v1129 = vsel %vm1119, %v1115, 1326507024
        %v1130 = vsel %vm1118, %v1112, %v1129
        %v1131 = vsel %vm1117, %v1128, %v1130
        %v1132 = vshll.u32 %v1092, 8
        %v1133 = vmul.u32.u64.compose %v1132, %v1131
        %v1134 = vextract.low.u32 %v1133
        %v1135 = vextract.high.u32 %v1133
        %v1136 = vmul.u32.u64.compose %v1132, %v1127
        %v1137 = vextract.low.u32 %v1136
        %v1138 = vextract.high.u32 %v1136
        %v1139 = vmul.u32 %v1132, %v1123
        %v1140 = vadd.s32 %v1135, %v1137
        %vm1141 = vc.u32 %v1135, %v1137
        %v1142 = vadd.s32 %v1138, 1
        %v1143 = vsel %vm1141, %v1142, %v1138
        %v1144 = vadd.s32 %v1139, %v1143
        %v1145 = vadd.s32 %v1144, 536870912
        %v1146 = vshrl.u32 %v1145, 30
        %v1147 = vshll.u32 %v1146, 30
        %v1148 = vsub.s32 %v1144, %v1147
        %vm1149 = vcmp.lt.s32.totalorder %v1148, 0
        %v1150 = vsub.s32 0, %v1148
        %v1151 = vsel %vm1149, %v1150, %v1148
        %v1152 = vclz %v1151
        %v1153 = vsub.s32 %v1152, 2
        %vm1154 = vcmp.gt.s32.totalorder 0, %v1153
        %v1155 = vsel %vm1154, 0, %v1153
        %v1156 = vsub.s32 32, %v1155
        %v1157 = vshll.u32 %v1148, %v1155
        %v1158 = vshrl.u32 %v1140, %v1156
        %v1159 = vor.u32 %v1157, %v1158
        %v1160 = vsub.s32 4294967266, %v1155
        %v1161 = vadd.s32 %v1160, 127
        %v1162 = vshll.u32 %v1161, 23
        %v1163 = vor.u32 4788187, %v1162
        %v1164 = vand.u32 2147483647, %v1163
        %v1166 = vcvt.s32.f32 %v1159
        %v1167 = vmul.f32 %v1166, %v1164
        %v1168 = vxor.u32 %v1167, 2147483648
        %v1169 = vsel %vm1086, %v1168, %v1167
        %v1170 = vsub.s32 4, %v1146
        %v1171 = vsel %vm1086, %v1170, %v1146
        %v1172 = vsel %vm1085, %v1082, %v1169
        %v1173 = vsel %vm1085, 0, %v1171
        %v1174 = vcosq.f32.pop %v1172
        %v1175 = vsinq.f32.pop %v1172
        %vm1176 = vweird.f32 %v1082
        %v1177 = vadd.s32 %v1173, 3
        %v1178 = vand.u32 %v1177, 3
        %vm1179 = vcmp.lt.s32.totalorder %v1178, 2
        %vm1180 = vcmp.eq.s32.totalorder %v1178, 0
        %v1181 = vxor.u32 %v1175, 2147483648
        %v1182 = vsel %vm1180, %v1174, %v1181
        %vm1183 = vcmp.eq.s32.totalorder %v1178, 2
        %v1184 = vxor.u32 %v1174, 2147483648
        %v1185 = vsel %vm1183, %v1184, %v1175
        %v1186 = vsel %vm1179, %v1182, %v1185
        %v1187 = vsel %vm1176, nan, %v1186
        %v1188 = vand.u32 2147483647, %v1083
        %vm1189 = vcmp.le.f32.partialorder %v1188, 0.7853982
        %vm1190 = vcmp.lt.s32.totalorder %v1083, 0
        %v1191 = vand.u32 %v1083, 2139095040
        %v1192 = vshrl.u32 %v1191, 23
        %v1193 = vsub.s32 %v1192, 127
        %v1194 = vand.u32 2147483647, %v1083
        %v1195 = vand.u32 %v1194, 8388607
        %v1196 = vor.u32 %v1195, 8388608
        %v1197 = vsub.s32 0, %v1196
        %v1198 = vadd.s32 %v1193, 1
        %vm1199 = vcmp.gt.s32.totalorder %v1198, 0
        %v1200 = vsel %vm1199, %v1198, 0
        %v1201 = vshrl.u32 %v1200, 5
        %v1202 = vand.u32 %v1200, 31
        %v1203 = vsub.s32 32, %v1202
        %v1204 = vshrl.u32 683565275, %v1203
        %v1205 = vshll.u32 683565275, %v1202
        %v1206 = vshrl.u32 2475754826, %v1203
        %v1207 = vor.u32 %v1205, %v1206
        %v1208 = vshll.u32 2475754826, %v1202
        %v1209 = vshrl.u32 2131351028, %v1203
        %v1210 = vor.u32 %v1208, %v1209
        %v1211 = vshll.u32 2131351028, %v1202
        %v1212 = vshrl.u32 2102212464, %v1203
        %v1213 = vor.u32 %v1211, %v1212
        %v1214 = vshll.u32 2102212464, %v1202
        %v1215 = vshrl.u32 920167782, %v1203
        %v1216 = vor.u32 %v1214, %v1215
        %v1217 = vshll.u32 920167782, %v1202
        %v1218 = vshrl.u32 1326507024, %v1203
        %v1219 = vor.u32 %v1217, %v1218
        %vm1220 = vcmp.lt.s32.totalorder %v1201, 1
        %vm1221 = vcmp.lt.s32.totalorder %v1201, 2
        %vm1222 = vcmp.lt.s32.totalorder %v1201, 3
        %vm1223 = vcmp.lt.s32.totalorder %v1201, 4
        %v1224 = vsel %vm1220, %v1204, %v1207
        %v1225 = vsel %vm1223, %v1213, 2102212464
        %v1226 = vsel %vm1222, %v1210, %v1225
        %v1227 = vsel %vm1221, %v1224, %v1226
        %v1228 = vsel %vm1220, %v1207, %v1210
        %v1229 = vsel %vm1223, %v1216, 920167782
        %v1230 = vsel %vm1222, %v1213, %v1229
        %v1231 = vsel %vm1221, %v1228, %v1230
        %v1232 = vsel %vm1220, %v1210, %v1213
        %v1233 = vsel %vm1223, %v1219, 1326507024
        %v1234 = vsel %vm1222, %v1216, %v1233
        %v1235 = vsel %vm1221, %v1232, %v1234
        %v1236 = vshll.u32 %v1196, 8
        %v1237 = vmul.u32.u64.compose %v1236, %v1235
        %v1238 = vextract.low.u32 %v1237
        %v1239 = vextract.high.u32 %v1237
        %v1240 = vmul.u32.u64.compose %v1236, %v1231
        %v1241 = vextract.low.u32 %v1240
        %v1242 = vextract.high.u32 %v1240
        %v1243 = vmul.u32 %v1236, %v1227
        %v1244 = vadd.s32 %v1239, %v1241
        %vm1245 = vc.u32 %v1239, %v1241
        %v1246 = vadd.s32 %v1242, 1
        %v1247 = vsel %vm1245, %v1246, %v1242
        %v1248 = vadd.s32 %v1243, %v1247
        %v1249 = vadd.s32 %v1248, 536870912
        %v1250 = vshrl.u32 %v1249, 30
        %v1251 = vshll.u32 %v1250, 30
        %v1252 = vsub.s32 %v1248, %v1251
        %vm1253 = vcmp.lt.s32.totalorder %v1252, 0
        %v1254 = vsub.s32 0, %v1252
        %v1255 = vsel %vm1253, %v1254, %v1252
        %v1256 = vclz %v1255
        %v1257 = vsub.s32 %v1256, 2
        %vm1258 = vcmp.gt.s32.totalorder 0, %v1257
        %v1259 = vsel %vm1258, 0, %v1257
        %v1260 = vsub.s32 32, %v1259
        %v1261 = vshll.u32 %v1252, %v1259
        %v1262 = vshrl.u32 %v1244, %v1260
        %v1263 = vor.u32 %v1261, %v1262
        %v1264 = vsub.s32 4294967266, %v1259
        %v1265 = vadd.s32 %v1264, 127
        %v1266 = vshll.u32 %v1265, 23
        %v1267 = vor.u32 4788187, %v1266
        %v1268 = vand.u32 2147483647, %v1267
        %v1270 = vcvt.s32.f32 %v1263
        %v1271 = vmul.f32 %v1270, %v1268
        %v1272 = vxor.u32 %v1271, 2147483648
        %v1273 = vsel %vm1190, %v1272, %v1271
        %v1274 = vsub.s32 4, %v1250
        %v1275 = vsel %vm1190, %v1274, %v1250
        %v1276 = vsel %vm1189, %v1083, %v1273
        %v1277 = vsel %vm1189, 0, %v1275
        %v1278 = vcosq.f32.pop %v1276
        %v1279 = vsinq.f32.pop %v1276
        %vm1280 = vweird.f32 %v1083
        %v1281 = vadd.s32 %v1277, 3
        %v1282 = vand.u32 %v1281, 3
        %vm1283 = vcmp.lt.s32.totalorder %v1282, 2
        %vm1284 = vcmp.eq.s32.totalorder %v1282, 0
        %v1285 = vxor.u32 %v1279, 2147483648
        %v1286 = vsel %vm1284, %v1278, %v1285
        %vm1287 = vcmp.eq.s32.totalorder %v1282, 2
        %v1288 = vxor.u32 %v1278, 2147483648
        %v1289 = vsel %vm1287, %v1288, %v1279
        %v1290 = vsel %vm1283, %v1286, %v1289
        %v1291 = vsel %vm1280, nan, %v1290
        %1292 = vst [vmem:[#allocation2 + $0x40] sm:$0xff] %v1187
        %1293 = vst [vmem:[#allocation2 + $0x48] sm:$0xff] %v1291
        %v1294 = vadd.f32 %v238, 1.5707964
        %v1295 = vadd.f32 %v239, 1.5707964
        %v1296 = vand.u32 2147483647, %v1294
        %vm1297 = vcmp.le.f32.partialorder %v1296, 0.7853982
        %vm1298 = vcmp.lt.s32.totalorder %v1294, 0
        %v1299 = vand.u32 %v1294, 2139095040
        %v1300 = vshrl.u32 %v1299, 23
        %v1301 = vsub.s32 %v1300, 127
        %v1302 = vand.u32 2147483647, %v1294
        %v1303 = vand.u32 %v1302, 8388607
        %v1304 = vor.u32 %v1303, 8388608
        %v1305 = vsub.s32 0, %v1304
        %v1306 = vadd.s32 %v1301, 1
        %vm1307 = vcmp.gt.s32.totalorder %v1306, 0
        %v1308 = vsel %vm1307, %v1306, 0
        %v1309 = vshrl.u32 %v1308, 5
        %v1310 = vand.u32 %v1308, 31
        %v1311 = vsub.s32 32, %v1310
        %v1312 = vshrl.u32 683565275, %v1311
        %v1313 = vshll.u32 683565275, %v1310
        %v1314 = vshrl.u32 2475754826, %v1311
        %v1315 = vor.u32 %v1313, %v1314
        %v1316 = vshll.u32 2475754826, %v1310
        %v1317 = vshrl.u32 2131351028, %v1311
        %v1318 = vor.u32 %v1316, %v1317
        %v1319 = vshll.u32 2131351028, %v1310
        %v1320 = vshrl.u32 2102212464, %v1311
        %v1321 = vor.u32 %v1319, %v1320
        %v1322 = vshll.u32 2102212464, %v1310
        %v1323 = vshrl.u32 920167782, %v1311
        %v1324 = vor.u32 %v1322, %v1323
        %v1325 = vshll.u32 920167782, %v1310
        %v1326 = vshrl.u32 1326507024, %v1311
        %v1327 = vor.u32 %v1325, %v1326
        %vm1328 = vcmp.lt.s32.totalorder %v1309, 1
        %vm1329 = vcmp.lt.s32.totalorder %v1309, 2
        %vm1330 = vcmp.lt.s32.totalorder %v1309, 3
        %vm1331 = vcmp.lt.s32.totalorder %v1309, 4
        %v1332 = vsel %vm1328, %v1312, %v1315
        %v1333 = vsel %vm1331, %v1321, 2102212464
        %v1334 = vsel %vm1330, %v1318, %v1333
        %v1335 = vsel %vm1329, %v1332, %v1334
        %v1336 = vsel %vm1328, %v1315, %v1318
        %v1337 = vsel %vm1331, %v1324, 920167782
        %v1338 = vsel %vm1330, %v1321, %v1337
        %v1339 = vsel %vm1329, %v1336, %v1338
        %v1340 = vsel %vm1328, %v1318, %v1321
        %v1341 = vsel %vm1331, %v1327, 1326507024
        %v1342 = vsel %vm1330, %v1324, %v1341
        %v1343 = vsel %vm1329, %v1340, %v1342
        %v1344 = vshll.u32 %v1304, 8
        %v1345 = vmul.u32.u64.compose %v1344, %v1343
        %v1346 = vextract.low.u32 %v1345
        %v1347 = vextract.high.u32 %v1345
        %v1348 = vmul.u32.u64.compose %v1344, %v1339
        %v1349 = vextract.low.u32 %v1348
        %v1350 = vextract.high.u32 %v1348
        %v1351 = vmul.u32 %v1344, %v1335
        %v1352 = vadd.s32 %v1347, %v1349
        %vm1353 = vc.u32 %v1347, %v1349
        %v1354 = vadd.s32 %v1350, 1
        %v1355 = vsel %vm1353, %v1354, %v1350
        %v1356 = vadd.s32 %v1351, %v1355
        %v1357 = vadd.s32 %v1356, 536870912
        %v1358 = vshrl.u32 %v1357, 30
        %v1359 = vshll.u32 %v1358, 30
        %v1360 = vsub.s32 %v1356, %v1359
        %vm1361 = vcmp.lt.s32.totalorder %v1360, 0
        %v1362 = vsub.s32 0, %v1360
        %v1363 = vsel %vm1361, %v1362, %v1360
        %v1364 = vclz %v1363
        %v1365 = vsub.s32 %v1364, 2
        %vm1366 = vcmp.gt.s32.totalorder 0, %v1365
        %v1367 = vsel %vm1366, 0, %v1365
        %v1368 = vsub.s32 32, %v1367
        %v1369 = vshll.u32 %v1360, %v1367
        %v1370 = vshrl.u32 %v1352, %v1368
        %v1371 = vor.u32 %v1369, %v1370
        %v1372 = vsub.s32 4294967266, %v1367
        %v1373 = vadd.s32 %v1372, 127
        %v1374 = vshll.u32 %v1373, 23
        %v1375 = vor.u32 4788187, %v1374
        %v1376 = vand.u32 2147483647, %v1375
        %v1378 = vcvt.s32.f32 %v1371
        %v1379 = vmul.f32 %v1378, %v1376
        %v1380 = vxor.u32 %v1379, 2147483648
        %v1381 = vsel %vm1298, %v1380, %v1379
        %v1382 = vsub.s32 4, %v1358
        %v1383 = vsel %vm1298, %v1382, %v1358
        %v1384 = vsel %vm1297, %v1294, %v1381
        %v1385 = vsel %vm1297, 0, %v1383
        %v1386 = vcosq.f32.pop %v1384
        %v1387 = vsinq.f32.pop %v1384
        %vm1388 = vweird.f32 %v1294
        %v1389 = vadd.s32 %v1385, 3
        %v1390 = vand.u32 %v1389, 3
        %vm1391 = vcmp.lt.s32.totalorder %v1390, 2
        %vm1392 = vcmp.eq.s32.totalorder %v1390, 0
        %v1393 = vxor.u32 %v1387, 2147483648
        %v1394 = vsel %vm1392, %v1386, %v1393
        %vm1395 = vcmp.eq.s32.totalorder %v1390, 2
        %v1396 = vxor.u32 %v1386, 2147483648
        %v1397 = vsel %vm1395, %v1396, %v1387
        %v1398 = vsel %vm1391, %v1394, %v1397
        %v1399 = vsel %vm1388, nan, %v1398
        %v1400 = vand.u32 2147483647, %v1295
        %vm1401 = vcmp.le.f32.partialorder %v1400, 0.7853982
        %vm1402 = vcmp.lt.s32.totalorder %v1295, 0
        %v1403 = vand.u32 %v1295, 2139095040
        %v1404 = vshrl.u32 %v1403, 23
        %v1405 = vsub.s32 %v1404, 127
        %v1406 = vand.u32 2147483647, %v1295
        %v1407 = vand.u32 %v1406, 8388607
        %v1408 = vor.u32 %v1407, 8388608
        %v1409 = vsub.s32 0, %v1408
        %v1410 = vadd.s32 %v1405, 1
        %vm1411 = vcmp.gt.s32.totalorder %v1410, 0
        %v1412 = vsel %vm1411, %v1410, 0
        %v1413 = vshrl.u32 %v1412, 5
        %v1414 = vand.u32 %v1412, 31
        %v1415 = vsub.s32 32, %v1414
        %v1416 = vshrl.u32 683565275, %v1415
        %v1417 = vshll.u32 683565275, %v1414
        %v1418 = vshrl.u32 2475754826, %v1415
        %v1419 = vor.u32 %v1417, %v1418
        %v1420 = vshll.u32 2475754826, %v1414
        %v1421 = vshrl.u32 2131351028, %v1415
        %v1422 = vor.u32 %v1420, %v1421
        %v1423 = vshll.u32 2131351028, %v1414
        %v1424 = vshrl.u32 2102212464, %v1415
        %v1425 = vor.u32 %v1423, %v1424
        %v1426 = vshll.u32 2102212464, %v1414
        %v1427 = vshrl.u32 920167782, %v1415
        %v1428 = vor.u32 %v1426, %v1427
        %v1429 = vshll.u32 920167782, %v1414
        %v1430 = vshrl.u32 1326507024, %v1415
        %v1431 = vor.u32 %v1429, %v1430
        %vm1432 = vcmp.lt.s32.totalorder %v1413, 1
        %vm1433 = vcmp.lt.s32.totalorder %v1413, 2
        %vm1434 = vcmp.lt.s32.totalorder %v1413, 3
        %vm1435 = vcmp.lt.s32.totalorder %v1413, 4
        %v1436 = vsel %vm1432, %v1416, %v1419
        %v1437 = vsel %vm1435, %v1425, 2102212464
        %v1438 = vsel %vm1434, %v1422, %v1437
        %v1439 = vsel %vm1433, %v1436, %v1438
        %v1440 = vsel %vm1432, %v1419, %v1422
        %v1441 = vsel %vm1435, %v1428, 920167782
        %v1442 = vsel %vm1434, %v1425, %v1441
        %v1443 = vsel %vm1433, %v1440, %v1442
        %v1444 = vsel %vm1432, %v1422, %v1425
        %v1445 = vsel %vm1435, %v1431, 1326507024
        %v1446 = vsel %vm1434, %v1428, %v1445
        %v1447 = vsel %vm1433, %v1444, %v1446
        %v1448 = vshll.u32 %v1408, 8
        %v1449 = vmul.u32.u64.compose %v1448, %v1447
        %v1450 = vextract.low.u32 %v1449
        %v1451 = vextract.high.u32 %v1449
        %v1452 = vmul.u32.u64.compose %v1448, %v1443
        %v1453 = vextract.low.u32 %v1452
        %v1454 = vextract.high.u32 %v1452
        %v1455 = vmul.u32 %v1448, %v1439
        %v1456 = vadd.s32 %v1451, %v1453
        %vm1457 = vc.u32 %v1451, %v1453
        %v1458 = vadd.s32 %v1454, 1
        %v1459 = vsel %vm1457, %v1458, %v1454
        %v1460 = vadd.s32 %v1455, %v1459
        %v1461 = vadd.s32 %v1460, 536870912
        %v1462 = vshrl.u32 %v1461, 30
        %v1463 = vshll.u32 %v1462, 30
        %v1464 = vsub.s32 %v1460, %v1463
        %vm1465 = vcmp.lt.s32.totalorder %v1464, 0
        %v1466 = vsub.s32 0, %v1464
        %v1467 = vsel %vm1465, %v1466, %v1464
        %v1468 = vclz %v1467
        %v1469 = vsub.s32 %v1468, 2
        %vm1470 = vcmp.gt.s32.totalorder 0, %v1469
        %v1471 = vsel %vm1470, 0, %v1469
        %v1472 = vsub.s32 32, %v1471
        %v1473 = vshll.u32 %v1464, %v1471
        %v1474 = vshrl.u32 %v1456, %v1472
        %v1475 = vor.u32 %v1473, %v1474
        %v1476 = vsub.s32 4294967266, %v1471
        %v1477 = vadd.s32 %v1476, 127
        %v1478 = vshll.u32 %v1477, 23
        %v1479 = vor.u32 4788187, %v1478
        %v1480 = vand.u32 2147483647, %v1479
        %v1482 = vcvt.s32.f32 %v1475
        %v1483 = vmul.f32 %v1482, %v1480
        %v1484 = vxor.u32 %v1483, 2147483648
        %v1485 = vsel %vm1402, %v1484, %v1483
        %v1486 = vsub.s32 4, %v1462
        %v1487 = vsel %vm1402, %v1486, %v1462
        %v1488 = vsel %vm1401, %v1295, %v1485
        %v1489 = vsel %vm1401, 0, %v1487
        %v1490 = vcosq.f32.pop %v1488
        %v1491 = vsinq.f32.pop %v1488
        %vm1492 = vweird.f32 %v1295
        %v1493 = vadd.s32 %v1489, 3
        %v1494 = vand.u32 %v1493, 3
        %vm1495 = vcmp.lt.s32.totalorder %v1494, 2
        %vm1496 = vcmp.eq.s32.totalorder %v1494, 0
        %v1497 = vxor.u32 %v1491, 2147483648
        %v1498 = vsel %vm1496, %v1490, %v1497
        %vm1499 = vcmp.eq.s32.totalorder %v1494, 2
        %v1500 = vxor.u32 %v1490, 2147483648
        %v1501 = vsel %vm1499, %v1500, %v1491
        %v1502 = vsel %vm1495, %v1498, %v1501
        %v1503 = vsel %vm1492, nan, %v1502
        %1504 = vst [vmem:[#allocation2 + $0x50] sm:$0xff] %v1399
        %1505 = vst [vmem:[#allocation2 + $0x58] sm:$0xff] %v1503
        %v1506 = vld [vmem:[%s1] sm:$0xff]
        %v1507 = vld [vmem:[%s1 + $0x8] sm:$0xff]
        %v1508 = vld [vmem:[%s1 + $0x10] sm:$0xff]
        %v1509 = vld [vmem:[%s1 + $0x18] sm:$0x1]
        %v1510 = vld [vmem:[#allocation2] sm:$0xff]
        %v1511 = vld [vmem:[#allocation2 + $0x8] sm:$0xff]
        %v1512 = vld [vmem:[#allocation2 + $0x10] sm:$0xff]
        %v1513 = vld [vmem:[#allocation2 + $0x18] sm:$0xff]
        %v1514 = vld [vmem:[#allocation2 + $0x20] sm:$0xff]
        %v1515 = vld [vmem:[#allocation2 + $0x28] sm:$0xff]
        %v1516 = vld [vmem:[#allocation2 + $0x30] sm:$0xff]
        %v1517 = vld [vmem:[#allocation2 + $0x38] sm:$0xff]
        %v1518 = vld [vmem:[#allocation2 + $0x40] sm:$0xff]
        %v1519 = vld [vmem:[#allocation2 + $0x48] sm:$0xff]
        %v1520 = vld [vmem:[#allocation2 + $0x50] sm:$0xff]
        %v1521 = vld [vmem:[#allocation2 + $0x58] sm:$0xff]
        %1523 = vset.pattern.permute.xlu0 0
        %1524 = vperm.xlu0 %1523, %v170
        %v1525 = vpop.permute.xlu0 %1524
        %1528 = vset.pattern.permute.xlu0 0
        %1529 = vperm.xlu0 %1528, %v171
        %v1530 = vpop.permute.xlu0 %1529
        %1533 = vset.pattern.permute.xlu0 0
        %1534 = vperm.xlu0 %1533, %v172
        %v1535 = vpop.permute.xlu0 %1534
        %1538 = vset.pattern.permute.xlu0 0
        %1539 = vperm.xlu0 %1538, %v173
        %v1540 = vpop.permute.xlu0 %1539
        %vm1542 = vcmask 392192
        %v1544 = vsel %vm1542, %v1506, 0
        %v1547 = vsel %vm1542, %v1507, 0
        %v1550 = vsel %vm1542, %v1508, 0
        %v1553 = vsel %vm1542, %v1509, 0
        %1555 = vmatprep.subr.mxu0 %v1511
        %1556 = vmatpush1.msra.mxu0 %v1510
        %1557 = vmatprep.subr.mxu0 %v1513
        %1558 = vmatpush1.msra.mxu0 %v1512
        %1559 = vmatprep.subr.mxu0 %v1515
        %1560 = vmatpush1.msra.mxu0 %v1514
        %1561 = vmatprep.subr.mxu0 %v1517
        %1562 = vmatpush1.msra.mxu0 %v1516
        %1563 = vmatprep.subr.mxu0 %v1519
        %1564 = vmatpush1.msra.mxu0 %v1518
        %1565 = vmatprep.subr.mxu0 %v1521
        %1566 = vmatpush1.msra.mxu0 %v1520
        %1567 = vmatprep.subr.mxu0 0.0
        %1568 = vmatpush1.msra.mxu0 0.0
        %1569 = vmatprep.subr.mxu0 0.0
        %1570 = vmatpush1.msra.mxu0 0.0
        %1571 = vmatprep.subr.mxu0 0.0
        %1572 = vmatpush1.msra.mxu0 0.0
        %1573 = vmatprep.subr.mxu0 0.0
        %1574 = vmatpush1.msra.mxu0 0.0
        %1575 = vmatprep.subr.mxu0 0.0
        %1576 = vmatpush1.msra.mxu0 0.0
        %1577 = vmatprep.subr.mxu0 0.0
        %1578 = vmatpush1.msra.mxu0 0.0
        %1579 = vmatprep.subr.mxu0 0.0
        %1580 = vmatpush1.msra.mxu0 0.0
        %1581 = vmatprep.subr.mxu0 0.0
        %1582 = vmatpush1.msra.mxu0 0.0
        %1583 = vmatprep.subr.mxu0 0.0
        %1584 = vmatpush1.msra.mxu0 0.0
        %1585 = vmatprep.subr.mxu0 0.0
        %1586 = vmatpush1.msra.mxu0 0.0
        %1587 = vmatprep.subr.mxu0 0.0
        %1588 = vmatpush1.msra.mxu0 0.0
        %1589 = vmatprep.subr.mxu0 0.0
        %1590 = vmatpush1.msra.mxu0 0.0
        %1591 = vmatprep.subr.mxu0 0.0
        %1592 = vmatpush1.msra.mxu0 0.0
        %1593 = vmatprep.subr.mxu0 0.0
        %1594 = vmatpush1.msra.mxu0 0.0
        %1595 = vmatprep.subr.mxu0 0.0
        %1596 = vmatpush1.msra.mxu0 0.0
        %1597 = vmatprep.subr.mxu0 0.0
        %1598 = vmatpush1.msra.mxu0 0.0
        %1599 = vmatprep.subr.mxu0 0.0
        %1600 = vmatpush1.msra.mxu0 0.0
        %1601 = vmatprep.subr.mxu0 0.0
        %1602 = vmatpush1.msra.mxu0 0.0
        %1603 = vmatprep.subr.mxu0 0.0
        %1604 = vmatpush1.msra.mxu0 0.0
        %1605 = vmatprep.subr.mxu0 0.0
        %1606 = vmatpush1.msra.mxu0 0.0
        %1607 = vmatprep.subr.mxu0 0.0
        %1608 = vmatpush1.msra.mxu0 0.0
        %1609 = vmatprep.subr.mxu0 0.0
        %1610 = vmatpush1.msra.mxu0 0.0
        %1611 = vmatprep.subr.mxu0 0.0
        %1612 = vmatpush1.msra.mxu0 0.0
        %1613 = vmatprep.subr.mxu0 0.0
        %1614 = vmatpush1.msra.mxu0 0.0
        %1615 = vmatprep.subr.mxu0 0.0
        %1616 = vmatpush1.msra.mxu0 0.0
        %1617 = vmatprep.subr.mxu0 0.0
        %1618 = vmatpush1.msra.mxu0 0.0
        %1619 = vmatprep.mubr.f32.mxu0 0.0
        %1620 = vmatmul.mubr.f32.gmra.mrb[0].mxu0 %v1544
        %v1621 = vpop.f32.mrb[0].mxu0
        %v1622 = vadd.f32 %v1525, %v1621
        %v1623 = vpop.f32.mrb[0].mxu0
        %v1624 = vadd.f32 %v1525, %v1623
        %1625 = vmatprep.mubr.f32.mxu0 0.0
        %1626 = vmatmul.mubr.f32.gmra.mrb[0].mxu0 %v1547
        %v1627 = vpop.f32.mrb[0].mxu0
        %v1628 = vadd.f32 %v1530, %v1627
        %v1629 = vpop.f32.mrb[0].mxu0
        %v1630 = vadd.f32 %v1530, %v1629
        %1631 = vmatprep.mubr.f32.mxu0 0.0
        %1632 = vmatmul.mubr.f32.gmra.mrb[0].mxu0 %v1550
        %v1633 = vpop.f32.mrb[0].mxu0
        %v1634 = vadd.f32 %v1535, %v1633
        %v1635 = vpop.f32.mrb[0].mxu0
        %v1636 = vadd.f32 %v1535, %v1635
        %1637 = vmatprep.mubr.f32.mxu0 0.0
        %1638 = vmatmul.mubr.f32.gmra.mrb[0].mxu0 %v1553
        %v1639 = vpop.f32.mrb[0].mxu0
        %v1640 = vadd.f32 %v1540, %v1639
        %v1641 = vpop.f32.mrb[0].mxu0
        %v1642 = vadd.f32 %v1540, %v1641
        %1643 = vdwg.mxu0
        %1644 = vst [vmem:[%s160] sm:$0xff] %v1622
        %1645 = vst [vmem:[%s160 + $0x8] sm:$0xff] %v1624
        %1646 = vst [vmem:[%s160 + $0x10] sm:$0xff] %v1628
        %1647 = vst [vmem:[%s160 + $0x18] sm:$0xff] %v1630
        %1648 = vst [vmem:[%s160 + $0x20] sm:$0xff] %v1634
        %1649 = vst [vmem:[%s160 + $0x28] sm:$0xff] %v1636
        %1650 = vst [vmem:[%s160 + $0x30] sm:$0x1] %v1640
        %1651 = vst [vmem:[%s160 + $0x38] sm:$0x1] %v1642
        %v1652 = vcombine.high %v168, %v168
        %v1653 = vrot.slane %v168, 2
        %v1654 = vrot.slane %v1652, 2
        %v1657 = vadd.f32 %v1622, %v1653
        %v1658 = vadd.f32 %v1624, %v1654
        %v1659 = vadd.f32 %v1628, %v1653
        %v1660 = vadd.f32 %v1630, %v1654
        %1661 = vst [vmem:[%s160] sm:$0xc0] %v1657
        %1662 = vst [vmem:[%s160 + $0x8] sm:$0xc0] %v1658
        %1663 = vst [vmem:[%s160 + $0x10] sm:$0x1] %v1659
        %1664 = vst [vmem:[%s160 + $0x18] sm:$0x1] %v1660
        %s1665 = sand.u32 %s90, 1
        %s1666 = sand.u32 %s90, 1
        %s1667 = smul.addr %s1666, 64
        %s1668 = scalar_lea.vmem [#allocation3], %s1667
        // Predicated region
        $region33: #{_forward_jit.1} parent=31 // pred_check
          %p1669 = pneg %p100
        $region34: #{_forward_jit.1} parent=31 // pred_check_branch
          %1671 = sbr.rel (%p1669) target = $region36
        $region35: #{_forward_jit.1} parent=31 // pred_region
          %s1672 = smul.u32 2, %s14
          %s1673 = smul.addr %s1672, 8
          %s1674 = scalar_lea.vmem %s3, %s1673
          // Predicated region
          $region37: #{_forward_jit.1} parent=35 // pred_check
            _
          $region38: #{_forward_jit.1} parent=35 // pred_check_branch
            %1676 = sbr.rel (0) target = $region40
          $region39: #{_forward_jit.1} parent=35 // pred_region
            // Predicated region
            $region41: #{_forward_jit.1} parent=39 // pred_check
              _
            $region42: #{_forward_jit.1} parent=39 // pred_check_branch
              %1678 = sbr.rel (0) target = $region44
            $region43: #{_forward_jit.1} parent=39 // pred_region
              loop: start=0, step=1, limit=1
              $region45: #{_forward_jit.1} parent=43 // loop_pre_header
                _
              $region46: #{_forward_jit.1} parent=43 // loop_header
                %s1680 = sphi 0, %s1684
                %p1681 = scmp.ge.s32.totalorder %s1680, 1
                %s1685 = sphi %s1668, %s1668
                %s1686 = sphi %s1674, %s1674
              $region47: #{_forward_jit.1} parent=43 // loop_header_branch
                %1683 = sbr.rel (%p1681) target = $region51
              $region48: #{_forward_jit.1} parent=43 // loop_body
                %v1687 = vld [vmem:[%s1685] sm:$0xff]
                %1688 = vst [vmem:[%s1686] sm:$0xff] %v1687
                %v1689 = vld [vmem:[%s1685 + $0x8] sm:$0xff]
                %1690 = vst [vmem:[%s1686 + $0x8] sm:$0xff] %v1689
                %v1691 = vld [vmem:[%s1685 + $0x10] sm:$0xff]
                %1692 = vst [vmem:[%s1686 + $0x20] sm:$0xff] %v1691
                %v1693 = vld [vmem:[%s1685 + $0x18] sm:$0xff]
                %1694 = vst [vmem:[%s1686 + $0x28] sm:$0xff] %v1693
                %v1695 = vld [vmem:[%s1685 + $0x20] sm:$0xff]
                %1696 = vst [vmem:[%s1686 + $0x40] sm:$0xff] %v1695
                %v1697 = vld [vmem:[%s1685 + $0x28] sm:$0xff]
                %1698 = vst [vmem:[%s1686 + $0x48] sm:$0xff] %v1697
                %v1699 = vld [vmem:[%s1685 + $0x30] sm:$0xff]
                %1700 = vst [vmem:[%s1686 + $0x60] sm:$0xff] %v1699
                %v1701 = vld [vmem:[%s1685 + $0x38] sm:$0xff]
                %1702 = vst [vmem:[%s1686 + $0x68] sm:$0xff] %v1701
              $region49: #{_forward_jit.1} parent=43 // loop_footer
                %s1684 = sadd.s32 1, %s1680
              $region50: #{_forward_jit.1} parent=43 // loop_footer_branch
                %1679 = sbr.rel target = $region46
              $region51: #{_forward_jit.1} parent=43 // loop_exit
                _
            $region44: #{_forward_jit.1} parent=39 // pred_fallthru
              _
            // Predicated region
            $region52: #{_forward_jit.1} parent=39 // pred_check
              _
            $region53: #{_forward_jit.1} parent=39 // pred_check_branch
              %1704 = sbr.rel target = $region55
            $region54: #{_forward_jit.1} parent=39 // pred_region
              _
            $region55: #{_forward_jit.1} parent=39 // pred_fallthru
              _
          $region40: #{_forward_jit.1} parent=35 // pred_fallthru
            _
          %1705 = vnop
        $region36: #{_forward_jit.1} parent=31 // pred_fallthru
          _
      $region32: #{_forward_jit.1} parent=5 // pred_fallthru
        _
      %p1706 = scmp.le.s32.totalorder 2, %s9
      // Predicated region
      $region56: #{_forward_jit.1} parent=5 // pred_check
        %p1707 = pneg %p1706
      $region57: #{_forward_jit.1} parent=5 // pred_check_branch
        %1709 = sbr.rel (%p1707) target = $region59
      $region58: #{_forward_jit.1} parent=5 // pred_region
        %s1710 = ssub.s32 %s9, 2
        // Predicated region
        $region60: #{_forward_jit.1} parent=58 // pred_check
          %p1711 = pneg %p106
        $region61: #{_forward_jit.1} parent=58 // pred_check_branch
          %1713 = sbr.rel (%p1711) target = $region63
        $region62: #{_forward_jit.1} parent=58 // pred_region
          %s1714 = sand.u32 %s91, 1
          %s1715 = sand.u32 %s91, 1
          %s1716 = smul.addr %s1715, 64
          %s1717 = scalar_lea.vmem [#allocation3], %s1716
        $region63: #{_forward_jit.1} parent=58 // pred_fallthru
          _
      $region59: #{_forward_jit.1} parent=5 // pred_fallthru
        _
    $region6: #{_forward_jit.1} parent=1 // loop_footer
      %s13 = sadd.s32 1, %s9
    $region7: #{_forward_jit.1} parent=1 // loop_footer_branch
      %8 = sbr.rel target = $region3
    $region8: #{_forward_jit.1} parent=1 // loop_exit
      _

</llo_original>
